<compile_context>
chip_gen: v5e
topology: v5e:2x2
jax: 0.10.0
libtpu: 0.0.40
codegen_flags: <defaults>
</compile_context>

<pallas_src>
import functools

import jax
import jax.numpy as jnp
from jax import lax
from jax.experimental import pallas as pl
from jax.experimental.pallas import tpu as pltpu

_EPS = 1e-5          # PyTorch BatchNorm2d default eps
_NEG_SLOPE = 0.2     # leaky_relu slope used by the module
_VMEM_LIMIT = 32 * 1024 * 1024   # safe on v5e/v6e (128 MiB) and v7x (64 MiB phys)


def _lrelu(x):
    return jnp.where(x >= 0, x, _NEG_SLOPE * x)


# ---------------------------------------------------------------------------
# Kernels.  All matmuls are "transposed": out^T (Cout, M) = W @ patches^T, so
# the lane axis is M (lane-dense stores) and BN stats are per-row reductions.
# Elementwise math stays in f32 (v5e has no bf16 VPU/EUP path).
# ---------------------------------------------------------------------------
def _conv_lrelu_kernel(w_ref, p_ref, o_ref):
    """conv (bf16 operands, f32 accumulation on the MXU) + leaky_relu."""
    acc = jnp.dot(w_ref[...], p_ref[...], preferred_element_type=jnp.float32)
    o_ref[...] = _lrelu(acc).astype(o_ref.dtype)


def _conv_bn_lrelu_kernel(w_ref, p_ref, g_ref, b_ref, o_ref):
    """conv + BatchNorm (training-mode batch stats, in-kernel) + leaky_relu."""
    acc = jnp.dot(w_ref[...], p_ref[...], preferred_element_type=jnp.float32)
    # E[x] and E[x^2] are independent cross-lane reductions (no serial chain).
    mean = jnp.mean(acc, axis=1, keepdims=True)                # (Cout, 1)
    msq = jnp.mean(acc * acc, axis=1, keepdims=True)           # (Cout, 1)
    var = msq - mean * mean                                    # biased (train mode)
    scale = g_ref[...] * lax.rsqrt(var + _EPS)
    shift = b_ref[...] - mean * scale
    o_ref[...] = _lrelu(acc * scale + shift).astype(o_ref.dtype)


def _conv_bn_lrelu_head_kernel(w_ref, p_ref, g_ref, b_ref, w5_ref, o_ref, *, n, hw):
    """conv4 + BN + leaky_relu fused with the conv5 head (a 4x4 valid conv ==
    full (c, i, j) contraction per batch element) and the final sigmoid."""
    acc = jnp.dot(w_ref[...], p_ref[...], preferred_element_type=jnp.float32)  # (C4, n*hw)
    mean = jnp.mean(acc, axis=1, keepdims=True)
    msq = jnp.mean(acc * acc, axis=1, keepdims=True)
    var = msq - mean * mean
    scale = g_ref[...] * lax.rsqrt(var + _EPS)
    shift = b_ref[...] - mean * scale
    y = _lrelu(acc * scale + shift)                            # (C4, n*hw) f32

    # conv5: logit[b] = sum_{c,i,j} y[c, b*hw + i*4 + j] * w5[c, i*4 + j].
    # Static per-batch lane slices + reductions: no batch-tiled w5 DMA and no
    # O(n^2) block-diagonal mask matmul.
    for b in range(n):
        t = y[:, b * hw:(b + 1) * hw] * w5_ref[...]            # (C4, hw)
        s = jnp.sum(t, axis=1, keepdims=True)                  # (C4, 1)
        s = jnp.sum(s, axis=0, keepdims=True)                  # (1, 1)
        o_ref[:, b:b + 1] = 1.0 / (1.0 + jnp.exp(-s))          # sigmoid


# ---------------------------------------------------------------------------
# pallas_call wrappers
# ---------------------------------------------------------------------------
def _full_spec(shape):
    nd = len(shape)
    return pl.BlockSpec(shape, lambda *_: (0,) * nd)


def _single_step_call(kernel, inputs, out_shape, out_dtype):
    """One grid step, full-array blocks (BN layers need full-M batch stats)."""
    return pl.pallas_call(
        kernel,
        out_shape=jax.ShapeDtypeStruct(out_shape, out_dtype),
        grid_spec=pltpu.PrefetchScalarGridSpec(
            num_scalar_prefetch=0,
            grid=(1,),
            in_specs=[_full_spec(x.shape) for x in inputs],
            out_specs=_full_spec(out_shape),
        ),
        compiler_params=pltpu.CompilerParams(
            dimension_semantics=("arbitrary",),
            vmem_limit_bytes=_VMEM_LIMIT),
    )(*inputs)


def _conv1_call(w, p, block_m=1024):
    """conv1 + leaky_relu, gridded over M with "parallel" semantics so v7x's
    two TensorCores split the work (harmless 2-step loop on v5e/v6e)."""
    cout, k = w.shape
    m = p.shape[1]
    if m % block_m != 0:
        block_m = m
    return pl.pallas_call(
        _conv_lrelu_kernel,
        out_shape=jax.ShapeDtypeStruct((cout, m), jnp.bfloat16),
        grid_spec=pltpu.PrefetchScalarGridSpec(
            num_scalar_prefetch=0,
            grid=(m // block_m,),
            in_specs=[pl.BlockSpec((cout, k), lambda i: (0, 0)),
                      pl.BlockSpec((k, block_m), lambda i: (0, i))],
            out_specs=pl.BlockSpec((cout, block_m), lambda i: (0, i)),
        ),
        compiler_params=pltpu.CompilerParams(
            dimension_semantics=("parallel",),
            vmem_limit_bytes=_VMEM_LIMIT),
    )(w, p)


# ---------------------------------------------------------------------------
# XLA glue: transposed im2col and the full forward pass
# ---------------------------------------------------------------------------
def _extract_patches_t(x_cnhw, k, stride, pad):
    """im2col in the transposed layout: (K, M) = (k*k*Cin, N*Ho*Wo), built in
    bf16.  Row order is (kh, kw, cin); column order is (n, ho, wo).  Stays in
    XLA glue: multi-axis strided window gathers have no robust in-kernel
    Mosaic lowering."""
    c, n, h, w = x_cnhw.shape
    xp = jnp.pad(x_cnhw, ((0, 0), (0, 0), (pad, pad), (pad, pad)))
    ho = (h + 2 * pad - k) // stride + 1
    wo = (w + 2 * pad - k) // stride + 1
    slabs = []
    for kh in range(k):
        for kw in range(k):
            slabs.append(xp[:, :, kh:kh + stride * ho:stride,
                            kw:kw + stride * wo:stride])
    p = jnp.stack(slabs, axis=0)                     # (k*k, Cin, N, Ho, Wo)
    return p.reshape(k * k * c, n * ho * wo), ho, wo


def _wmat(w_oihw):
    """(Cout, Cin, kh, kw) -> (Cout, kh*kw*Cin), matching the patch row order."""
    cout = w_oihw.shape[0]
    return jnp.transpose(w_oihw, (0, 2, 3, 1)).reshape(cout, -1)


def discriminator_forward(x_nchw, params):
    n = x_nchw.shape[0]
    # NCHW -> CNHW once (channel-major activations match the transposed matmuls).
    x = jnp.transpose(x_nchw, (1, 0, 2, 3)).astype(jnp.bfloat16)

    # conv1 + leaky_relu.
    pt, ho, wo = _extract_patches_t(x, 4, 2, 1)
    w1 = _wmat(params["w1"]).astype(jnp.bfloat16)
    y = _conv1_call(w1, pt)                                    # (c1, M) bf16
    x = y.reshape(w1.shape[0], n, ho, wo)

    # conv2 / conv3: conv + BatchNorm(batch stats) + leaky_relu, fused per layer.
    for idx in (2, 3):
        pt, ho, wo = _extract_patches_t(x, 4, 2, 1)
        w = _wmat(params[f"w{idx}"]).astype(jnp.bfloat16)
        c = w.shape[0]
        y = _single_step_call(
            _conv_bn_lrelu_kernel,
            [w, pt, params[f"gamma{idx}"].reshape(c, 1),
             params[f"beta{idx}"].reshape(c, 1)],
            (c, pt.shape[1]), jnp.bfloat16)
        x = y.reshape(c, n, ho, wo)

    # conv4 + BN + leaky_relu + conv5 + sigmoid, all in ONE kernel.
    pt, ho, wo = _extract_patches_t(x, 4, 2, 1)                # ho = wo = 4
    w4 = _wmat(params["w4"]).astype(jnp.bfloat16)
    c4 = w4.shape[0]
    w5 = params["w5"][0].reshape(c4, ho * wo).astype(jnp.float32)   # (C4, 16)
    out = _single_step_call(
        functools.partial(_conv_bn_lrelu_head_kernel, n=n, hw=ho * wo),
        [w4, pt, params["gamma4"].reshape(c4, 1),
         params["beta4"].reshape(c4, 1), w5],
        (1, n), jnp.float32)
    return out.reshape(n, 1, 1, 1)                             # (N, 1, 1, 1)


# ---------------------------------------------------------------------------
# Pure-JAX f32 reference (PyTorch semantics, BN in training mode)
# ---------------------------------------------------------------------------
def _reference_forward(x, params):
    def conv(h, w, stride, pad):
        return lax.conv_general_dilated(
            h, w, (stride, stride), [(pad, pad), (pad, pad)],
            dimension_numbers=("NCHW", "OIHW", "NCHW"))

    def bn(h, gamma, beta):
        mu = jnp.mean(h, axis=(0, 2, 3), keepdims=True)
        var = jnp.mean((h - mu) ** 2, axis=(0, 2, 3), keepdims=True)
        return (gamma.reshape(1, -1, 1, 1) * (h - mu) * lax.rsqrt(var + _EPS)
                + beta.reshape(1, -1, 1, 1))

    h = _lrelu(conv(x, params["w1"], 2, 1))
    h = _lrelu(bn(conv(h, params["w2"], 2, 1), params["gamma2"], params["beta2"]))
    h = _lrelu(bn(conv(h, params["w3"], 2, 1), params["gamma3"], params["beta3"]))
    h = _lrelu(bn(conv(h, params["w4"], 2, 1), params["gamma4"], params["beta4"]))
    return jax.nn.sigmoid(conv(h, params["w5"], 1, 0))


# ---------------------------------------------------------------------------
# Deterministic parameter construction (synthetic, DCGAN-style init)
# ---------------------------------------------------------------------------
def make_params(conv_dim, key):
    ks = jax.random.split(key, 5)
    d = conv_dim

    def w(k, cout, cin):
        return 0.02 * jax.random.normal(k, (cout, cin, 4, 4), jnp.float32)

    params = {
        "w1": w(ks[0], d, 3),
        "w2": w(ks[1], 2 * d, d),
        "w3": w(ks[2], 4 * d, 2 * d),
        "w4": w(ks[3], 8 * d, 4 * d),
        "w5": w(ks[4], 1, 8 * d),
    }
    for idx, c in zip((2, 3, 4), (2 * d, 4 * d, 8 * d)):
        params[f"gamma{idx}"] = jnp.ones((c,), jnp.float32)    # PyTorch default
        params[f"beta{idx}"] = jnp.zeros((c,), jnp.float32)    # PyTorch default
    return params


if __name__ == "__main__":
    key = jax.random.PRNGKey(0)
    k_x, k_p = jax.random.split(key)

    conv_dim = 8
    # 64x64 is the minimum spatial size admitted by this architecture
    # (four stride-2 convs then a 4x4 valid conv -> 1x1 output).
    x = jax.random.normal(k_x, (2, 3, 64, 64), jnp.float32)    # NCHW like PyTorch
    params = make_params(conv_dim, k_p)

    out = jax.jit(discriminator_forward)(x, params)
    out = jax.block_until_ready(out)

    assert out.shape == (2, 1, 1, 1), out.shape
    assert bool(jnp.all((out >= 0.0) & (out <= 1.0)))          # sigmoid range

    # Numerical check vs. the f32 reference (bf16 matmul operands -> loose tol).
    ref = _reference_forward(x, params)
    assert bool(jnp.max(jnp.abs(out - ref)) < 5e-2)

    print("KERNEL_OK")
</pallas_src>

<mosaic_0001>
module attributes {stable_mosaic.version = 11 : i64} {
  func.func @_conv_lrelu_kernel(%arg0: i32, %arg1: memref<8x48xbf16, #tpu.memory_space<vmem>>, %arg2: memref<48x1024xbf16, #tpu.memory_space<vmem>>, %arg3: memref<8x1024xbf16, #tpu.memory_space<vmem>>) attributes {dimension_semantics = [#tpu.dimension_semantics<parallel>], iteration_bounds = array<i64: 2>, scalar_prefetch = 0 : i64, scratch_operands = 0 : i64, tpu.core_type = #tpu.core_type<tc>, window_params = [{pipeline_mode = #tpu.pipeline_mode<synchronous>, transform_indices = @transform_0, window_bounds = array<i64: 8, 48>}, {transform_indices = @transform_1, window_bounds = array<i64: 48, 1024>}, {transform_indices = @transform_2, window_bounds = array<i64: 8, 1024>}]} {
    %c0 = arith.constant 0 : index
    %c0_0 = arith.constant 0 : index
    %0 = vector.load %arg1[%c0, %c0_0] : memref<8x48xbf16, #tpu.memory_space<vmem>>, vector<8x48xbf16>
    %c0_1 = arith.constant 0 : index
    %c0_2 = arith.constant 0 : index
    %1 = vector.load %arg2[%c0_1, %c0_2] : memref<48x1024xbf16, #tpu.memory_space<vmem>>, vector<48x1024xbf16>
    %cst = arith.constant dense<0.000000e+00> : vector<8x1024xf32>
    %2 = tpu.matmul %0, %1, %cst {dimension_numbers = #tpu.dot_dimension_numbers<[1], [0], [0], [1], [0, 0, 1, 1], [], []>} : vector<8x48xbf16>, vector<48x1024xbf16>, vector<8x1024xf32> -> vector<8x1024xf32>
    %cst_3 = arith.constant 0.000000e+00 : f32
    %3 = vector.broadcast %cst_3 : f32 to vector<8x1024xf32>
    %4 = arith.cmpf oge, %2, %3 : vector<8x1024xf32>
    %cst_4 = arith.constant 2.000000e-01 : f32
    %5 = vector.broadcast %cst_4 : f32 to vector<8x1024xf32>
    %6 = arith.mulf %5, %2 : vector<8x1024xf32>
    %7 = arith.select %4, %2, %6 : vector<8x1024xi1>, vector<8x1024xf32>
    %8 = arith.truncf %7 : vector<8x1024xf32> to vector<8x1024xbf16>
    %c0_5 = arith.constant 0 : index
    %c0_6 = arith.constant 0 : index
    %9 = vector.load %arg3[%c0_5, %c0_6] : memref<8x1024xbf16, #tpu.memory_space<vmem>>, vector<8x1024xbf16>
    tpu.vector_store %arg3[%c0_5, %c0_6], %8 {strides = array<i32>} : memref<8x1024xbf16, #tpu.memory_space<vmem>>, vector<8x1024xbf16>,
    return
  }
  func.func @transform_0(%arg0: i32) -> (i32, i32) {
    %c0_i32 = arith.constant 0 : i32
    %c0_i32_0 = arith.constant 0 : i32
    %c0_i32_1 = arith.constant 0 : i32
    return %c0_i32, %c0_i32_0 : i32, i32
  }
  func.func @transform_1(%arg0: i32) -> (i32, i32) {
    %c0_i32 = arith.constant 0 : i32
    %c0_i32_0 = arith.constant 0 : i32
    return %c0_i32, %arg0 : i32, i32
  }
  func.func @transform_2(%arg0: i32) -> (i32, i32) {
    %c0_i32 = arith.constant 0 : i32
    %c0_i32_0 = arith.constant 0 : i32
    return %c0_i32, %arg0 : i32, i32
  }
}

module attributes {stable_mosaic.version = 11 : i64} {
  func.func @_conv_bn_lrelu_kernel(%arg0: i32, %arg1: memref<16x128xbf16, #tpu.memory_space<vmem>>, %arg2: memref<128x512xbf16, #tpu.memory_space<vmem>>, %arg3: memref<16x1xf32, #tpu.memory_space<vmem>>, %arg4: memref<16x1xf32, #tpu.memory_space<vmem>>, %arg5: memref<16x512xbf16, #tpu.memory_space<vmem>>) attributes {dimension_semantics = [#tpu.dimension_semantics<arbitrary>], iteration_bounds = array<i64: 1>, scalar_prefetch = 0 : i64, scratch_operands = 0 : i64, tpu.core_type = #tpu.core_type<tc>, window_params = [{pipeline_mode = #tpu.pipeline_mode<synchronous>, transform_indices = @transform_0, window_bounds = array<i64: 16, 128>}, {pipeline_mode = #tpu.pipeline_mode<synchronous>, transform_indices = @transform_1, window_bounds = array<i64: 128, 512>}, {pipeline_mode = #tpu.pipeline_mode<synchronous>, transform_indices = @transform_2, window_bounds = array<i64: 16, 1>}, {pipeline_mode = #tpu.pipeline_mode<synchronous>, transform_indices = @transform_3, window_bounds = array<i64: 16, 1>}, {pipeline_mode = #tpu.pipeline_mode<synchronous>, transform_indices = @transform_4, window_bounds = array<i64: 16, 512>}]} {
    %c0 = arith.constant 0 : index
    %c0_0 = arith.constant 0 : index
    %0 = vector.load %arg1[%c0, %c0_0] : memref<16x128xbf16, #tpu.memory_space<vmem>>, vector<16x128xbf16>
    %c0_1 = arith.constant 0 : index
    %c0_2 = arith.constant 0 : index
    %1 = vector.load %arg2[%c0_1, %c0_2] : memref<128x512xbf16, #tpu.memory_space<vmem>>, vector<128x512xbf16>
    %cst = arith.constant dense<0.000000e+00> : vector<16x512xf32>
    %2 = tpu.matmul %0, %1, %cst {dimension_numbers = #tpu.dot_dimension_numbers<[1], [0], [0], [1], [0, 0, 1, 1], [], []>} : vector<16x128xbf16>, vector<128x512xbf16>, vector<16x512xf32> -> vector<16x512xf32>
    %cst_3 = arith.constant dense<0.000000e+00> : vector<16xf32>
    %3 = vector.multi_reduction <add>, %2, %cst_3 [1] : vector<16x512xf32> to vector<16xf32>
    %4 = vector.shape_cast %3 : vector<16xf32> to vector<16x1xf32>
    %cst_4 = arith.constant 5.120000e+02 : f32
    %5 = vector.broadcast %cst_4 : f32 to vector<16x1xf32>
    %6 = arith.divf %4, %5 : vector<16x1xf32>
    %7 = arith.mulf %2, %2 : vector<16x512xf32>
    %cst_5 = arith.constant dense<0.000000e+00> : vector<16xf32>
    %8 = vector.multi_reduction <add>, %7, %cst_5 [1] : vector<16x512xf32> to vector<16xf32>
    %9 = vector.shape_cast %8 : vector<16xf32> to vector<16x1xf32>
    %cst_6 = arith.constant 5.120000e+02 : f32
    %10 = vector.broadcast %cst_6 : f32 to vector<16x1xf32>
    %11 = arith.divf %9, %10 : vector<16x1xf32>
    %12 = arith.mulf %6, %6 : vector<16x1xf32>
    %13 = arith.subf %11, %12 : vector<16x1xf32>
    %c0_7 = arith.constant 0 : index
    %c0_8 = arith.constant 0 : index
    %14 = vector.load %arg3[%c0_7, %c0_8] : memref<16x1xf32, #tpu.memory_space<vmem>>, vector<16x1xf32>
    %cst_9 = arith.constant 9.99999974E-6 : f32
    %15 = vector.broadcast %cst_9 : f32 to vector<16x1xf32>
    %16 = arith.addf %13, %15 : vector<16x1xf32>
    %17 = math.rsqrt %16 : vector<16x1xf32>
    %18 = arith.mulf %14, %17 : vector<16x1xf32>
    %c0_10 = arith.constant 0 : index
    %c0_11 = arith.constant 0 : index
    %19 = vector.load %arg4[%c0_10, %c0_11] : memref<16x1xf32, #tpu.memory_space<vmem>>, vector<16x1xf32>
    %20 = arith.mulf %6, %18 : vector<16x1xf32>
    %21 = arith.subf %19, %20 : vector<16x1xf32>
    %22 = vector.broadcast %18 : vector<16x1xf32> to vector<16x512xf32>
    %23 = arith.mulf %2, %22 : vector<16x512xf32>
    %24 = vector.broadcast %21 : vector<16x1xf32> to vector<16x512xf32>
    %25 = arith.addf %23, %24 : vector<16x512xf32>
    %cst_12 = arith.constant 0.000000e+00 : f32
    %26 = vector.broadcast %cst_12 : f32 to vector<16x512xf32>
    %27 = arith.cmpf oge, %25, %26 : vector<16x512xf32>
    %cst_13 = arith.constant 2.000000e-01 : f32
    %28 = vector.broadcast %cst_13 : f32 to vector<16x512xf32>
    %29 = arith.mulf %28, %25 : vector<16x512xf32>
    %30 = arith.select %27, %25, %29 : vector<16x512xi1>, vector<16x512xf32>
    %31 = arith.truncf %30 : vector<16x512xf32> to vector<16x512xbf16>
    %c0_14 = arith.constant 0 : index
    %c0_15 = arith.constant 0 : index
    %32 = vector.load %arg5[%c0_14, %c0_15] : memref<16x512xbf16, #tpu.memory_space<vmem>>, vector<16x512xbf16>
    tpu.vector_store %arg5[%c0_14, %c0_15], %31 {strides = array<i32>} : memref<16x512xbf16, #tpu.memory_space<vmem>>, vector<16x512xbf16>,
    return
  }
  func.func @transform_0(%arg0: i32) -> (i32, i32) {
    %c0_i32 = arith.constant 0 : i32
    %c0_i32_0 = arith.constant 0 : i32
    %c0_i32_1 = arith.constant 0 : i32
    return %c0_i32, %c0_i32_0 : i32, i32
  }
  func.func @transform_1(%arg0: i32) -> (i32, i32) {
    %c0_i32 = arith.constant 0 : i32
    %c0_i32_0 = arith.constant 0 : i32
    %c0_i32_1 = arith.constant 0 : i32
    return %c0_i32, %c0_i32_0 : i32, i32
  }
  func.func @transform_2(%arg0: i32) -> (i32, i32) {
    %c0_i32 = arith.constant 0 : i32
    %c0_i32_0 = arith.constant 0 : i32
    %c0_i32_1 = arith.constant 0 : i32
    return %c0_i32, %c0_i32_0 : i32, i32
  }
  func.func @transform_3(%arg0: i32) -> (i32, i32) {
    %c0_i32 = arith.constant 0 : i32
    %c0_i32_0 = arith.constant 0 : i32
    %c0_i32_1 = arith.constant 0 : i32
    return %c0_i32, %c0_i32_0 : i32, i32
  }
  func.func @transform_4(%arg0: i32) -> (i32, i32) {
    %c0_i32 = arith.constant 0 : i32
    %c0_i32_0 = arith.constant 0 : i32
    %c0_i32_1 = arith.constant 0 : i32
    return %c0_i32, %c0_i32_0 : i32, i32
  }
}

module attributes {stable_mosaic.version = 11 : i64} {
  func.func @_conv_bn_lrelu_kernel(%arg0: i32, %arg1: memref<32x256xbf16, #tpu.memory_space<vmem>>, %arg2: memref<256x128xbf16, #tpu.memory_space<vmem>>, %arg3: memref<32x1xf32, #tpu.memory_space<vmem>>, %arg4: memref<32x1xf32, #tpu.memory_space<vmem>>, %arg5: memref<32x128xbf16, #tpu.memory_space<vmem>>) attributes {dimension_semantics = [#tpu.dimension_semantics<arbitrary>], iteration_bounds = array<i64: 1>, scalar_prefetch = 0 : i64, scratch_operands = 0 : i64, tpu.core_type = #tpu.core_type<tc>, window_params = [{pipeline_mode = #tpu.pipeline_mode<synchronous>, transform_indices = @transform_0, window_bounds = array<i64: 32, 256>}, {pipeline_mode = #tpu.pipeline_mode<synchronous>, transform_indices = @transform_1, window_bounds = array<i64: 256, 128>}, {pipeline_mode = #tpu.pipeline_mode<synchronous>, transform_indices = @transform_2, window_bounds = array<i64: 32, 1>}, {pipeline_mode = #tpu.pipeline_mode<synchronous>, transform_indices = @transform_3, window_bounds = array<i64: 32, 1>}, {pipeline_mode = #tpu.pipeline_mode<synchronous>, transform_indices = @transform_4, window_bounds = array<i64: 32, 128>}]} {
    %c0 = arith.constant 0 : index
    %c0_0 = arith.constant 0 : index
    %0 = vector.load %arg1[%c0, %c0_0] : memref<32x256xbf16, #tpu.memory_space<vmem>>, vector<32x256xbf16>
    %c0_1 = arith.constant 0 : index
    %c0_2 = arith.constant 0 : index
    %1 = vector.load %arg2[%c0_1, %c0_2] : memref<256x128xbf16, #tpu.memory_space<vmem>>, vector<256x128xbf16>
    %cst = arith.constant dense<0.000000e+00> : vector<32x128xf32>
    %2 = tpu.matmul %0, %1, %cst {dimension_numbers = #tpu.dot_dimension_numbers<[1], [0], [0], [1], [0, 0, 1, 1], [], []>} : vector<32x256xbf16>, vector<256x128xbf16>, vector<32x128xf32> -> vector<32x128xf32>
    %cst_3 = arith.constant dense<0.000000e+00> : vector<32xf32>
    %3 = vector.multi_reduction <add>, %2, %cst_3 [1] : vector<32x128xf32> to vector<32xf32>
    %4 = vector.shape_cast %3 : vector<32xf32> to vector<32x1xf32>
    %cst_4 = arith.constant 1.280000e+02 : f32
    %5 = vector.broadcast %cst_4 : f32 to vector<32x1xf32>
    %6 = arith.divf %4, %5 : vector<32x1xf32>
    %7 = arith.mulf %2, %2 : vector<32x128xf32>
    %cst_5 = arith.constant dense<0.000000e+00> : vector<32xf32>
    %8 = vector.multi_reduction <add>, %7, %cst_5 [1] : vector<32x128xf32> to vector<32xf32>
    %9 = vector.shape_cast %8 : vector<32xf32> to vector<32x1xf32>
    %cst_6 = arith.constant 1.280000e+02 : f32
    %10 = vector.broadcast %cst_6 : f32 to vector<32x1xf32>
    %11 = arith.divf %9, %10 : vector<32x1xf32>
    %12 = arith.mulf %6, %6 : vector<32x1xf32>
    %13 = arith.subf %11, %12 : vector<32x1xf32>
    %c0_7 = arith.constant 0 : index
    %c0_8 = arith.constant 0 : index
    %14 = vector.load %arg3[%c0_7, %c0_8] : memref<32x1xf32, #tpu.memory_space<vmem>>, vector<32x1xf32>
    %cst_9 = arith.constant 9.99999974E-6 : f32
    %15 = vector.broadcast %cst_9 : f32 to vector<32x1xf32>
    %16 = arith.addf %13, %15 : vector<32x1xf32>
    %17 = math.rsqrt %16 : vector<32x1xf32>
    %18 = arith.mulf %14, %17 : vector<32x1xf32>
    %c0_10 = arith.constant 0 : index
    %c0_11 = arith.constant 0 : index
    %19 = vector.load %arg4[%c0_10, %c0_11] : memref<32x1xf32, #tpu.memory_space<vmem>>, vector<32x1xf32>
    %20 = arith.mulf %6, %18 : vector<32x1xf32>
    %21 = arith.subf %19, %20 : vector<32x1xf32>
    %22 = vector.broadcast %18 : vector<32x1xf32> to vector<32x128xf32>
    %23 = arith.mulf %2, %22 : vector<32x128xf32>
    %24 = vector.broadcast %21 : vector<32x1xf32> to vector<32x128xf32>
    %25 = arith.addf %23, %24 : vector<32x128xf32>
    %cst_12 = arith.constant 0.000000e+00 : f32
    %26 = vector.broadcast %cst_12 : f32 to vector<32x128xf32>
    %27 = arith.cmpf oge, %25, %26 : vector<32x128xf32>
    %cst_13 = arith.constant 2.000000e-01 : f32
    %28 = vector.broadcast %cst_13 : f32 to vector<32x128xf32>
    %29 = arith.mulf %28, %25 : vector<32x128xf32>
    %30 = arith.select %27, %25, %29 : vector<32x128xi1>, vector<32x128xf32>
    %31 = arith.truncf %30 : vector<32x128xf32> to vector<32x128xbf16>
    %c0_14 = arith.constant 0 : index
    %c0_15 = arith.constant 0 : index
    %32 = vector.load %arg5[%c0_14, %c0_15] : memref<32x128xbf16, #tpu.memory_space<vmem>>, vector<32x128xbf16>
    tpu.vector_store %arg5[%c0_14, %c0_15], %31 {strides = array<i32>} : memref<32x128xbf16, #tpu.memory_space<vmem>>, vector<32x128xbf16>,
    return
  }
  func.func @transform_0(%arg0: i32) -> (i32, i32) {
    %c0_i32 = arith.constant 0 : i32
    %c0_i32_0 = arith.constant 0 : i32
    %c0_i32_1 = arith.constant 0 : i32
    return %c0_i32, %c0_i32_0 : i32, i32
  }
  func.func @transform_1(%arg0: i32) -> (i32, i32) {
    %c0_i32 = arith.constant 0 : i32
    %c0_i32_0 = arith.constant 0 : i32
    %c0_i32_1 = arith.constant 0 : i32
    return %c0_i32, %c0_i32_0 : i32, i32
  }
  func.func @transform_2(%arg0: i32) -> (i32, i32) {
    %c0_i32 = arith.constant 0 : i32
    %c0_i32_0 = arith.constant 0 : i32
    %c0_i32_1 = arith.constant 0 : i32
    return %c0_i32, %c0_i32_0 : i32, i32
  }
  func.func @transform_3(%arg0: i32) -> (i32, i32) {
    %c0_i32 = arith.constant 0 : i32
    %c0_i32_0 = arith.constant 0 : i32
    %c0_i32_1 = arith.constant 0 : i32
    return %c0_i32, %c0_i32_0 : i32, i32
  }
  func.func @transform_4(%arg0: i32) -> (i32, i32) {
    %c0_i32 = arith.constant 0 : i32
    %c0_i32_0 = arith.constant 0 : i32
    %c0_i32_1 = arith.constant 0 : i32
    return %c0_i32, %c0_i32_0 : i32, i32
  }
}

module attributes {stable_mosaic.version = 11 : i64} {
  func.func @_conv_bn_lrelu_head_kernel(%arg0: i32, %arg1: memref<64x512xbf16, #tpu.memory_space<vmem>>, %arg2: memref<512x32xbf16, #tpu.memory_space<vmem>>, %arg3: memref<64x1xf32, #tpu.memory_space<vmem>>, %arg4: memref<64x1xf32, #tpu.memory_space<vmem>>, %arg5: memref<64x16xf32, #tpu.memory_space<vmem>>, %arg6: memref<1x2xf32, #tpu.memory_space<vmem>>) attributes {dimension_semantics = [#tpu.dimension_semantics<arbitrary>], iteration_bounds = array<i64: 1>, scalar_prefetch = 0 : i64, scratch_operands = 0 : i64, tpu.core_type = #tpu.core_type<tc>, window_params = [{pipeline_mode = #tpu.pipeline_mode<synchronous>, transform_indices = @transform_0, window_bounds = array<i64: 64, 512>}, {pipeline_mode = #tpu.pipeline_mode<synchronous>, transform_indices = @transform_1, window_bounds = array<i64: 512, 32>}, {pipeline_mode = #tpu.pipeline_mode<synchronous>, transform_indices = @transform_2, window_bounds = array<i64: 64, 1>}, {pipeline_mode = #tpu.pipeline_mode<synchronous>, transform_indices = @transform_3, window_bounds = array<i64: 64, 1>}, {pipeline_mode = #tpu.pipeline_mode<synchronous>, transform_indices = @transform_4, window_bounds = array<i64: 64, 16>}, {pipeline_mode = #tpu.pipeline_mode<synchronous>, transform_indices = @transform_5, window_bounds = array<i64: 1, 2>}]} {
    %c0 = arith.constant 0 : index
    %c0_0 = arith.constant 0 : index
    %0 = vector.load %arg1[%c0, %c0_0] : memref<64x512xbf16, #tpu.memory_space<vmem>>, vector<64x512xbf16>
    %c0_1 = arith.constant 0 : index
    %c0_2 = arith.constant 0 : index
    %1 = vector.load %arg2[%c0_1, %c0_2] : memref<512x32xbf16, #tpu.memory_space<vmem>>, vector<512x32xbf16>
    %cst = arith.constant dense<0.000000e+00> : vector<64x32xf32>
    %2 = tpu.matmul %0, %1, %cst {dimension_numbers = #tpu.dot_dimension_numbers<[1], [0], [0], [1], [0, 0, 1, 1], [], []>} : vector<64x512xbf16>, vector<512x32xbf16>, vector<64x32xf32> -> vector<64x32xf32>
    %cst_3 = arith.constant dense<0.000000e+00> : vector<64xf32>
    %3 = vector.multi_reduction <add>, %2, %cst_3 [1] : vector<64x32xf32> to vector<64xf32>
    %4 = vector.shape_cast %3 : vector<64xf32> to vector<64x1xf32>
    %cst_4 = arith.constant 3.200000e+01 : f32
    %5 = vector.broadcast %cst_4 : f32 to vector<64x1xf32>
    %6 = arith.divf %4, %5 : vector<64x1xf32>
    %7 = arith.mulf %2, %2 : vector<64x32xf32>
    %cst_5 = arith.constant dense<0.000000e+00> : vector<64xf32>
    %8 = vector.multi_reduction <add>, %7, %cst_5 [1] : vector<64x32xf32> to vector<64xf32>
    %9 = vector.shape_cast %8 : vector<64xf32> to vector<64x1xf32>
    %cst_6 = arith.constant 3.200000e+01 : f32
    %10 = vector.broadcast %cst_6 : f32 to vector<64x1xf32>
    %11 = arith.divf %9, %10 : vector<64x1xf32>
    %12 = arith.mulf %6, %6 : vector<64x1xf32>
    %13 = arith.subf %11, %12 : vector<64x1xf32>
    %c0_7 = arith.constant 0 : index
    %c0_8 = arith.constant 0 : index
    %14 = vector.load %arg3[%c0_7, %c0_8] : memref<64x1xf32, #tpu.memory_space<vmem>>, vector<64x1xf32>
    %cst_9 = arith.constant 9.99999974E-6 : f32
    %15 = vector.broadcast %cst_9 : f32 to vector<64x1xf32>
    %16 = arith.addf %13, %15 : vector<64x1xf32>
    %17 = math.rsqrt %16 : vector<64x1xf32>
    %18 = arith.mulf %14, %17 : vector<64x1xf32>
    %c0_10 = arith.constant 0 : index
    %c0_11 = arith.constant 0 : index
    %19 = vector.load %arg4[%c0_10, %c0_11] : memref<64x1xf32, #tpu.memory_space<vmem>>, vector<64x1xf32>
    %20 = arith.mulf %6, %18 : vector<64x1xf32>
    %21 = arith.subf %19, %20 : vector<64x1xf32>
    %22 = vector.broadcast %18 : vector<64x1xf32> to vector<64x32xf32>
    %23 = arith.mulf %2, %22 : vector<64x32xf32>
    %24 = vector.broadcast %21 : vector<64x1xf32> to vector<64x32xf32>
    %25 = arith.addf %23, %24 : vector<64x32xf32>
    %cst_12 = arith.constant 0.000000e+00 : f32
    %26 = vector.broadcast %cst_12 : f32 to vector<64x32xf32>
    %27 = arith.cmpf oge, %25, %26 : vector<64x32xf32>
    %cst_13 = arith.constant 2.000000e-01 : f32
    %28 = vector.broadcast %cst_13 : f32 to vector<64x32xf32>
    %29 = arith.mulf %28, %25 : vector<64x32xf32>
    %30 = arith.select %27, %25, %29 : vector<64x32xi1>, vector<64x32xf32>
    %31 = vector.extract_strided_slice %30 {offsets = [0, 0], sizes = [64, 16], strides = [1, 1]} : vector<64x32xf32> to vector<64x16xf32>
    %c0_14 = arith.constant 0 : index
    %c0_15 = arith.constant 0 : index
    %32 = vector.load %arg5[%c0_14, %c0_15] : memref<64x16xf32, #tpu.memory_space<vmem>>, vector<64x16xf32>
    %33 = arith.mulf %31, %32 : vector<64x16xf32>
    %cst_16 = arith.constant dense<0.000000e+00> : vector<64xf32>
    %34 = vector.multi_reduction <add>, %33, %cst_16 [1] : vector<64x16xf32> to vector<64xf32>
    %35 = vector.shape_cast %34 : vector<64xf32> to vector<64x1xf32>
    %cst_17 = arith.constant dense<0.000000e+00> : vector<1xf32>
    %36 = vector.multi_reduction <add>, %35, %cst_17 [0] : vector<64x1xf32> to vector<1xf32>
    %37 = vector.shape_cast %36 : vector<1xf32> to vector<1x1xf32>
    %cst_18 = arith.constant 0.000000e+00 : f32
    %38 = vector.broadcast %cst_18 : f32 to vector<1x1xf32>
    %39 = arith.subf %38, %37 : vector<1x1xf32>
    %40 = math.exp %39 : vector<1x1xf32>
    %cst_19 = arith.constant 1.000000e+00 : f32
    %41 = vector.broadcast %cst_19 : f32 to vector<1x1xf32>
    %42 = arith.addf %41, %40 : vector<1x1xf32>
    %cst_20 = arith.constant 1.000000e+00 : f32
    %43 = vector.broadcast %cst_20 : f32 to vector<1x1xf32>
    %44 = arith.divf %43, %42 : vector<1x1xf32>
    %c0_21 = arith.constant 0 : index
    %c0_22 = arith.constant 0 : index
    %45 = vector.load %arg6[%c0_21, %c0_22] : memref<1x2xf32, #tpu.memory_space<vmem>>, vector<1x1xf32>
    tpu.vector_store %arg6[%c0_21, %c0_22], %44 {strides = array<i32>} : memref<1x2xf32, #tpu.memory_space<vmem>>, vector<1x1xf32>,
    %46 = vector.extract_strided_slice %30 {offsets = [0, 16], sizes = [64, 16], strides = [1, 1]} : vector<64x32xf32> to vector<64x16xf32>
    %c0_23 = arith.constant 0 : index
    %c0_24 = arith.constant 0 : index
    %47 = vector.load %arg5[%c0_23, %c0_24] : memref<64x16xf32, #tpu.memory_space<vmem>>, vector<64x16xf32>
    %48 = arith.mulf %46, %47 : vector<64x16xf32>
    %cst_25 = arith.constant dense<0.000000e+00> : vector<64xf32>
    %49 = vector.multi_reduction <add>, %48, %cst_25 [1] : vector<64x16xf32> to vector<64xf32>
    %50 = vector.shape_cast %49 : vector<64xf32> to vector<64x1xf32>
    %cst_26 = arith.constant dense<0.000000e+00> : vector<1xf32>
    %51 = vector.multi_reduction <add>, %50, %cst_26 [0] : vector<64x1xf32> to vector<1xf32>
    %52 = vector.shape_cast %51 : vector<1xf32> to vector<1x1xf32>
    %cst_27 = arith.constant 0.000000e+00 : f32
    %53 = vector.broadcast %cst_27 : f32 to vector<1x1xf32>
    %54 = arith.subf %53, %52 : vector<1x1xf32>
    %55 = math.exp %54 : vector<1x1xf32>
    %cst_28 = arith.constant 1.000000e+00 : f32
    %56 = vector.broadcast %cst_28 : f32 to vector<1x1xf32>
    %57 = arith.addf %56, %55 : vector<1x1xf32>
    %cst_29 = arith.constant 1.000000e+00 : f32
    %58 = vector.broadcast %cst_29 : f32 to vector<1x1xf32>
    %59 = arith.divf %58, %57 : vector<1x1xf32>
    %c0_30 = arith.constant 0 : index
    %c1 = arith.constant 1 : index
    %60 = vector.load %arg6[%c0_30, %c1] : memref<1x2xf32, #tpu.memory_space<vmem>>, vector<1x1xf32>
    tpu.vector_store %arg6[%c0_30, %c1], %59 {strides = array<i32>} : memref<1x2xf32, #tpu.memory_space<vmem>>, vector<1x1xf32>,
    return
  }
  func.func @transform_0(%arg0: i32) -> (i32, i32) {
    %c0_i32 = arith.constant 0 : i32
    %c0_i32_0 = arith.constant 0 : i32
    %c0_i32_1 = arith.constant 0 : i32
    return %c0_i32, %c0_i32_0 : i32, i32
  }
  func.func @transform_1(%arg0: i32) -> (i32, i32) {
    %c0_i32 = arith.constant 0 : i32
    %c0_i32_0 = arith.constant 0 : i32
    %c0_i32_1 = arith.constant 0 : i32
    return %c0_i32, %c0_i32_0 : i32, i32
  }
  func.func @transform_2(%arg0: i32) -> (i32, i32) {
    %c0_i32 = arith.constant 0 : i32
    %c0_i32_0 = arith.constant 0 : i32
    %c0_i32_1 = arith.constant 0 : i32
    return %c0_i32, %c0_i32_0 : i32, i32
  }
  func.func @transform_3(%arg0: i32) -> (i32, i32) {
    %c0_i32 = arith.constant 0 : i32
    %c0_i32_0 = arith.constant 0 : i32
    %c0_i32_1 = arith.constant 0 : i32
    return %c0_i32, %c0_i32_0 : i32, i32
  }
  func.func @transform_4(%arg0: i32) -> (i32, i32) {
    %c0_i32 = arith.constant 0 : i32
    %c0_i32_0 = arith.constant 0 : i32
    %c0_i32_1 = arith.constant 0 : i32
    return %c0_i32, %c0_i32_0 : i32, i32
  }
  func.func @transform_5(%arg0: i32) -> (i32, i32) {
    %c0_i32 = arith.constant 0 : i32
    %c0_i32_0 = arith.constant 0 : i32
    %c0_i32_1 = arith.constant 0 : i32
    return %c0_i32, %c0_i32_0 : i32, i32
  }
}

</mosaic_0001>

<llo_original>
// kernel: discriminator_forward.4
$region0: #{discriminator_forward.4}
  #allocation0 [shape = 'u32[]', space=smem, size = 0x4, offset = 0x4, fixed_abs, tag = 'smem constant byte address 0x4 - core index']
  #allocation1 [shape = 'u32[72,128]{1,0:T(1,128)}', space=vmem, size = 0x9000, scoped, tag = 'internal scratch']
  %s0 = inlined_call_operand.vmem [shape: bf16[8,48], index: 0, kind: input, shape index: {}]
  %s1 = inlined_call_operand.vmem [shape: bf16[48,2048], index: 1, kind: input, shape index: {}]
  %s2 = inlined_call_operand.vmem [shape: bf16[8,2048], index: 2, kind: output, shape index: {}]
  %s3 = sld [smem:[#allocation0]]
  $region64: #{discriminator_forward.4} parent=0
    _
  %s5 = ssub.s32 1, %s3
  %s6 = scalar_select 0, %s5, %s3
  $region1: #{discriminator_forward.4} parent=0
    #allocation2 [shape = 'u8[196608]{0}', space=vmem, size = 0x30000, scoped, tag = 'input window, operand 1']
    loop: start=0, step=1, limit=4
    $region2: #{discriminator_forward.4} parent=1 // loop_pre_header
      _
    $region3: #{discriminator_forward.4} parent=1 // loop_header
      %s8 = sphi 0, %s12
      %p9 = scmp.ge.s32.totalorder %s8, 4
      %s16 = sphi 0, %s16
      %s18 = sphi 0, %s16
      %s19 = sphi 0, %s18
      %s33 = sphi 0, %s19
      %s39 = sphi 0, %s41
      %s42 = sphi 0, %s39
      %s43 = sphi 0, %s42
      %s59 = sphi 0, %s43
      %s65 = sphi 0, %s67
      %s68 = sphi 0, %s65
      %s69 = sphi 0, %s68
      %s85 = sphi 0, %s69
    $region4: #{discriminator_forward.4} parent=1 // loop_header_branch
      %11 = sbr.rel (%p9) target = $region8
    $region5: #{discriminator_forward.4} parent=1 // loop_body
      %s13 = ssub.s32 %s8, 1
      %s14 = ssub.s32 %s8, 2
      %s15 = sadd.s32 %s8, 1
      %s17 = sadd.s32 %s16, 1
      %p20 = scmp.eq.s32.totalorder %s8, 1
      %p21 = scmp.ne.s32.totalorder %s16, %s18
      %p22 = scmp.eq.s32.totalorder %s8, 0
      %p23 = por %p21, %p22
      %p24 = scmp.ne.s32.totalorder %s16, %s18
      %p25 = scmp.eq.s32.totalorder %s13, 1
      %p26 = por %p24, %p25
      %p27 = scmp.ne.s32.totalorder %s18, %s19
      %p28 = scmp.eq.s32.totalorder %s13, 0
      %p29 = por %p27, %p28
      %p30 = scmp.ne.s32.totalorder %s18, %s19
      %p31 = scmp.eq.s32.totalorder %s14, 1
      %p32 = por %p30, %p31
      %p34 = scmp.ne.s32.totalorder %s19, %s33
      %p35 = scmp.eq.s32.totalorder %s14, 0
      %p36 = por %p34, %p35
      %s37 = ssub.s32 %s8, %s15
      %p38 = scmp.eq.s32.totalorder %s37, 0
      %s40 = sadd.s32 %s39, 1
      %s41 = scalar_select %p38, %s39, %s40
      %p44 = pneg %p38
      %p45 = scmp.eq.s32.totalorder %s8, 1
      %p46 = por %p44, %p45
      %p47 = scmp.ne.s32.totalorder %s39, %s42
      %p48 = scmp.eq.s32.totalorder %s8, 0
      %p49 = por %p47, %p48
      %p50 = scmp.ne.s32.totalorder %s39, %s42
      %p51 = scmp.eq.s32.totalorder %s13, 1
      %p52 = por %p50, %p51
      %p53 = scmp.ne.s32.totalorder %s42, %s43
      %p54 = scmp.eq.s32.totalorder %s13, 0
      %p55 = por %p53, %p54
      %p56 = scmp.ne.s32.totalorder %s42, %s43
      %p57 = scmp.eq.s32.totalorder %s14, 1
      %p58 = por %p56, %p57
      %p60 = scmp.ne.s32.totalorder %s43, %s59
      %p61 = scmp.eq.s32.totalorder %s14, 0
      %p62 = por %p60, %p61
      %s63 = ssub.s32 %s8, %s15
      %p64 = scmp.eq.s32.totalorder %s63, 0
      %s66 = sadd.s32 %s65, 1
      %s67 = scalar_select %p64, %s65, %s66
      %p70 = pneg %p64
      %p71 = scmp.eq.s32.totalorder %s8, 1
      %p72 = por %p70, %p71
      %p73 = scmp.ne.s32.totalorder %s65, %s68
      %p74 = scmp.eq.s32.totalorder %s8, 0
      %p75 = por %p73, %p74
      %p76 = scmp.ne.s32.totalorder %s65, %s68
      %p77 = scmp.eq.s32.totalorder %s13, 1
      %p78 = por %p76, %p77
      %p79 = scmp.ne.s32.totalorder %s68, %s69
      %p80 = scmp.eq.s32.totalorder %s13, 0
      %p81 = por %p79, %p80
      %p82 = scmp.ne.s32.totalorder %s68, %s69
      %p83 = scmp.eq.s32.totalorder %s14, 1
      %p84 = por %p82, %p83
      %p86 = scmp.ne.s32.totalorder %s69, %s85
      %p87 = scmp.eq.s32.totalorder %s14, 0
      %p88 = por %p86, %p87
      %p89 = scmp.le.s32.totalorder 1, %s8
      %p90 = scmp.lt.s32.totalorder %s8, 3
      %p91 = pnand %p89, %p90
      %p92 = pneg %p91
      // Predicated region
      $region9: #{discriminator_forward.4} parent=5 // pred_check
        _
      $region10: #{discriminator_forward.4} parent=5 // pred_check_branch
        %94 = sbr.rel (%p91) target = $region12
      $region11: #{discriminator_forward.4} parent=5 // pred_region
        %s95 = ssub.s32 %s8, 1
        // Predicated region
        $region13: #{discriminator_forward.4} parent=11 // pred_check
          %p96 = pneg %p29
        $region14: #{discriminator_forward.4} parent=11 // pred_check_branch
          %98 = sbr.rel (%p96) target = $region16
        $region15: #{discriminator_forward.4} parent=11 // pred_region
          _
        $region16: #{discriminator_forward.4} parent=11 // pred_fallthru
          _
      $region12: #{discriminator_forward.4} parent=5 // pred_fallthru
        _
      %p99 = scmp.lt.s32.totalorder %s8, 2
      // Predicated region
      $region17: #{discriminator_forward.4} parent=5 // pred_check
        %p100 = pneg %p99
      $region18: #{discriminator_forward.4} parent=5 // pred_check_branch
        %102 = sbr.rel (%p100) target = $region20
      $region19: #{discriminator_forward.4} parent=5 // pred_region
        // Predicated region
        $region21: #{discriminator_forward.4} parent=19 // pred_check
          %p103 = pneg %p49
        $region22: #{discriminator_forward.4} parent=19 // pred_check_branch
          %105 = sbr.rel (%p103) target = $region24
        $region23: #{discriminator_forward.4} parent=19 // pred_region
          %s106 = sand.u32 %s39, 1
          %s107 = sand.u32 %s39, 1
          %s108 = smul.addr %s107, 192
          %s109 = scalar_lea.vmem [#allocation2], %s108
          %s110 = smul.u32 8, %s8
          %s111 = smul.addr %s110, 4
          %s112 = scalar_lea.vmem %s1, %s111
          // Predicated region
          $region25: #{discriminator_forward.4} parent=23 // pred_check
            _
          $region26: #{discriminator_forward.4} parent=23 // pred_check_branch
            %114 = sbr.rel (0) target = $region28
          $region27: #{discriminator_forward.4} parent=23 // pred_region
            // Predicated region
            $region29: #{discriminator_forward.4} parent=27 // pred_check
              _
            $region30: #{discriminator_forward.4} parent=27 // pred_check_branch
              %116 = sbr.rel (0) target = $region32
            $region31: #{discriminator_forward.4} parent=27 // pred_region
              loop: start=0, step=1, limit=1
              $region33: #{discriminator_forward.4} parent=31 // loop_pre_header
                _
              $region34: #{discriminator_forward.4} parent=31 // loop_header
                %s118 = sphi 0, %s122
                %p119 = scmp.ge.s32.totalorder %s118, 1
                %s123 = sphi %s112, %s112
                %s124 = sphi %s109, %s109
              $region35: #{discriminator_forward.4} parent=31 // loop_header_branch
                %121 = sbr.rel (%p119) target = $region39
              $region36: #{discriminator_forward.4} parent=31 // loop_body
                %v125 = vld [vmem:[%s123] sm:$0xff]
                %126 = vst [vmem:[%s124] sm:$0xff] %v125
                %v127 = vld [vmem:[%s123 + $0x8] sm:$0xff]
                %128 = vst [vmem:[%s124 + $0x8] sm:$0xff] %v127
                %v129 = vld [vmem:[%s123 + $0x10] sm:$0xff]
                %130 = vst [vmem:[%s124 + $0x10] sm:$0xff] %v129
                %v131 = vld [vmem:[%s123 + $0x18] sm:$0xff]
                %132 = vst [vmem:[%s124 + $0x18] sm:$0xff] %v131
                %v133 = vld [vmem:[%s123 + $0x40] sm:$0xff]
                %134 = vst [vmem:[%s124 + $0x20] sm:$0xff] %v133
                %v135 = vld [vmem:[%s123 + $0x48] sm:$0xff]
                %136 = vst [vmem:[%s124 + $0x28] sm:$0xff] %v135
                %v137 = vld [vmem:[%s123 + $0x50] sm:$0xff]
                %138 = vst [vmem:[%s124 + $0x30] sm:$0xff] %v137
                %v139 = vld [vmem:[%s123 + $0x58] sm:$0xff]
                %140 = vst [vmem:[%s124 + $0x38] sm:$0xff] %v139
                %v141 = vld [vmem:[%s123 + $0x80] sm:$0xff]
                %142 = vst [vmem:[%s124 + $0x40] sm:$0xff] %v141
                %v143 = vld [vmem:[%s123 + $0x88] sm:$0xff]
                %144 = vst [vmem:[%s124 + $0x48] sm:$0xff] %v143
                %v145 = vld [vmem:[%s123 + $0x90] sm:$0xff]
                %146 = vst [vmem:[%s124 + $0x50] sm:$0xff] %v145
                %v147 = vld [vmem:[%s123 + $0x98] sm:$0xff]
                %148 = vst [vmem:[%s124 + $0x58] sm:$0xff] %v147
                %v149 = vld [vmem:[%s123 + $0xc0] sm:$0xff]
                %150 = vst [vmem:[%s124 + $0x60] sm:$0xff] %v149
                %v151 = vld [vmem:[%s123 + $0xc8] sm:$0xff]
                %152 = vst [vmem:[%s124 + $0x68] sm:$0xff] %v151
                %v153 = vld [vmem:[%s123 + $0xd0] sm:$0xff]
                %154 = vst [vmem:[%s124 + $0x70] sm:$0xff] %v153
                %v155 = vld [vmem:[%s123 + $0xd8] sm:$0xff]
                %156 = vst [vmem:[%s124 + $0x78] sm:$0xff] %v155
                %v157 = vld [vmem:[%s123 + $0x100] sm:$0xff]
                %158 = vst [vmem:[%s124 + $0x80] sm:$0xff] %v157
                %v159 = vld [vmem:[%s123 + $0x108] sm:$0xff]
                %160 = vst [vmem:[%s124 + $0x88] sm:$0xff] %v159
                %v161 = vld [vmem:[%s123 + $0x110] sm:$0xff]
                %162 = vst [vmem:[%s124 + $0x90] sm:$0xff] %v161
                %v163 = vld [vmem:[%s123 + $0x118] sm:$0xff]
                %164 = vst [vmem:[%s124 + $0x98] sm:$0xff] %v163
                %v165 = vld [vmem:[%s123 + $0x140] sm:$0xff]
                %166 = vst [vmem:[%s124 + $0xa0] sm:$0xff] %v165
                %v167 = vld [vmem:[%s123 + $0x148] sm:$0xff]
                %168 = vst [vmem:[%s124 + $0xa8] sm:$0xff] %v167
                %v169 = vld [vmem:[%s123 + $0x150] sm:$0xff]
                %170 = vst [vmem:[%s124 + $0xb0] sm:$0xff] %v169
                %v171 = vld [vmem:[%s123 + $0x158] sm:$0xff]
                %172 = vst [vmem:[%s124 + $0xb8] sm:$0xff] %v171
              $region37: #{discriminator_forward.4} parent=31 // loop_footer
                %s122 = sadd.s32 1, %s118
              $region38: #{discriminator_forward.4} parent=31 // loop_footer_branch
                %117 = sbr.rel target = $region34
              $region39: #{discriminator_forward.4} parent=31 // loop_exit
                _
            $region32: #{discriminator_forward.4} parent=27 // pred_fallthru
              _
            // Predicated region
            $region40: #{discriminator_forward.4} parent=27 // pred_check
              _
            $region41: #{discriminator_forward.4} parent=27 // pred_check_branch
              %174 = sbr.rel target = $region43
            $region42: #{discriminator_forward.4} parent=27 // pred_region
              _
            $region43: #{discriminator_forward.4} parent=27 // pred_fallthru
              _
          $region28: #{discriminator_forward.4} parent=23 // pred_fallthru
            _
          %175 = vnop
        $region24: #{discriminator_forward.4} parent=19 // pred_fallthru
          _
      $region20: #{discriminator_forward.4} parent=5 // pred_fallthru
        _
      %p176 = scmp.le.s32.totalorder 1, %s8
      %p177 = scmp.lt.s32.totalorder %s8, 3
      %p178 = pnand %p176, %p177
      %p179 = pneg %p178
      // Predicated region
      $region44: #{discriminator_forward.4} parent=5 // pred_check
        _
      $region45: #{discriminator_forward.4} parent=5 // pred_check_branch
        %181 = sbr.rel (%p178) target = $region47
      $region46: #{discriminator_forward.4} parent=5 // pred_region
        %s182 = ssub.s32 %s8, 1
        %s183 = sand.u32 %s42, 1
        %s184 = sand.u32 %s42, 1
        %s185 = smul.addr %s184, 192
        %s186 = scalar_lea.vmem [#allocation2], %s185
        // Predicated region
        $region48: #{discriminator_forward.4} parent=46 // pred_check
          %p187 = pneg %p55
        $region49: #{discriminator_forward.4} parent=46 // pred_check_branch
          %189 = sbr.rel (%p187) target = $region51
        $region50: #{discriminator_forward.4} parent=46 // pred_region
          _
        $region51: #{discriminator_forward.4} parent=46 // pred_fallthru
          _
        %p190 = pneg %p29
        %p191 = pneg %p26
        %s192 = sand.u32 %s42, 1
        %s193 = sand.u32 %s42, 1
        %s194 = smul.addr %s193, 192
        %s195 = scalar_lea.vmem [#allocation2], %s194
        %p196 = pneg %p55
        %p197 = pneg %p52
        %p198 = pneg %p81
        %p199 = pneg %p78
        %s200 = smul.u32 8, %s13
        %p201 = scmp.lt.s32.totalorder %s200, 15
        %s202 = scalar_select %p201, %s200, 15
        %s203 = smul.addr %s202, 4
        %s204 = scalar_lea.vmem %s2, %s203
        %s205 = smul.u32 8, %s13
        %s206 = smul.u32 8, %s13
        %p207 = scmp.lt.s32.totalorder %s206, 15
        %s208 = scalar_select %p207, %s206, 15
        %s209 = smul.addr %s208, 4
        %s210 = scalar_lea.vmem %s2, %s209
        %s211 = smul.u32 8, %s13
        %v213 = vld [vmem:[%s0] sm:$0xf]
        %v214 = vld [vmem:[%s186] sm:$0xff]
        %v215 = vld [vmem:[%s186 + $0x8] sm:$0xff]
        %v216 = vld [vmem:[%s186 + $0x10] sm:$0xff]
        %v217 = vld [vmem:[%s186 + $0x18] sm:$0xff]
        %v218 = vld [vmem:[%s186 + $0x20] sm:$0xff]
        %v219 = vld [vmem:[%s186 + $0x28] sm:$0xff]
        %v220 = vld [vmem:[%s186 + $0x30] sm:$0xff]
        %v221 = vld [vmem:[%s186 + $0x38] sm:$0xff]
        %v222 = vld [vmem:[%s186 + $0x40] sm:$0xff]
        %v223 = vld [vmem:[%s186 + $0x48] sm:$0xff]
        %v224 = vld [vmem:[%s186 + $0x50] sm:$0xff]
        %v225 = vld [vmem:[%s186 + $0x58] sm:$0xff]
        %v226 = vld [vmem:[%s186 + $0x60] sm:$0xff]
        %v227 = vld [vmem:[%s186 + $0x68] sm:$0xff]
        %v228 = vld [vmem:[%s186 + $0x70] sm:$0xff]
        %v229 = vld [vmem:[%s186 + $0x78] sm:$0xff]
        %v230 = vld [vmem:[%s186 + $0x80] sm:$0xff]
        %v231 = vld [vmem:[%s186 + $0x88] sm:$0xff]
        %v232 = vld [vmem:[%s186 + $0x90] sm:$0xff]
        %v233 = vld [vmem:[%s186 + $0x98] sm:$0xff]
        %v234 = vld [vmem:[%s186 + $0xa0] sm:$0xff]
        %v235 = vld [vmem:[%s186 + $0xa8] sm:$0xff]
        %v236 = vld [vmem:[%s186 + $0xb0] sm:$0xff]
        %v237 = vld [vmem:[%s186 + $0xb8] sm:$0xff]
        %v262 = vunpack.c.l.b16 %v214
        %v263 = vunpack.c.h.b16 %v214
        %v264 = vunpack.c.l.b16 %v215
        %v265 = vunpack.c.h.b16 %v215
        %v266 = vunpack.c.l.b16 %v216
        %v267 = vunpack.c.h.b16 %v216
        %v268 = vunpack.c.l.b16 %v217
        %v269 = vunpack.c.h.b16 %v217
        %v270 = vunpack.c.l.b16 %v218
        %v271 = vunpack.c.h.b16 %v218
        %v272 = vunpack.c.l.b16 %v219
        %v273 = vunpack.c.h.b16 %v219
        %v274 = vunpack.c.l.b16 %v220
        %v275 = vunpack.c.h.b16 %v220
        %v276 = vunpack.c.l.b16 %v221
        %v277 = vunpack.c.h.b16 %v221
        %v278 = vunpack.c.l.b16 %v222
        %v279 = vunpack.c.h.b16 %v222
        %v280 = vunpack.c.l.b16 %v223
        %v281 = vunpack.c.h.b16 %v223
        %v282 = vunpack.c.l.b16 %v224
        %v283 = vunpack.c.h.b16 %v224
        %v284 = vunpack.c.l.b16 %v225
        %v285 = vunpack.c.h.b16 %v225
        %v286 = vunpack.c.l.b16 %v226
        %v287 = vunpack.c.h.b16 %v226
        %v288 = vunpack.c.l.b16 %v227
        %v289 = vunpack.c.h.b16 %v227
        %v290 = vunpack.c.l.b16 %v228
        %v291 = vunpack.c.h.b16 %v228
        %v292 = vunpack.c.l.b16 %v229
        %v293 = vunpack.c.h.b16 %v229
        %v294 = vunpack.c.l.b16 %v230
        %v295 = vunpack.c.h.b16 %v230
        %v296 = vunpack.c.l.b16 %v231
        %v297 = vunpack.c.h.b16 %v231
        %v298 = vunpack.c.l.b16 %v232
        %v299 = vunpack.c.h.b16 %v232
        %v300 = vunpack.c.l.b16 %v233
        %v301 = vunpack.c.h.b16 %v233
        %v302 = vunpack.c.l.b16 %v234
        %v303 = vunpack.c.h.b16 %v234
        %v304 = vunpack.c.l.b16 %v235
        %v305 = vunpack.c.h.b16 %v235
        %v306 = vunpack.c.l.b16 %v236
        %v307 = vunpack.c.h.b16 %v236
        %v308 = vunpack.c.l.b16 %v237
        %v309 = vunpack.c.h.b16 %v237
        %v310 = vpack.c.b16 %v270, %v262
        %v311 = vpack.c.b16 %v271, %v263
        %v312 = vpack.c.b16 %v272, %v264
        %v313 = vpack.c.b16 %v273, %v265
        %v314 = vpack.c.b16 %v274, %v266
        %v315 = vpack.c.b16 %v275, %v267
        %v316 = vpack.c.b16 %v276, %v268
        %v317 = vpack.c.b16 %v277, %v269
        %v318 = vpack.c.b16 %v286, %v278
        %v319 = vpack.c.b16 %v287, %v279
        %v320 = vpack.c.b16 %v288, %v280
        %v321 = vpack.c.b16 %v289, %v281
        %v322 = vpack.c.b16 %v290, %v282
        %v323 = vpack.c.b16 %v291, %v283
        %v324 = vpack.c.b16 %v292, %v284
        %v325 = vpack.c.b16 %v293, %v285
        %v326 = vpack.c.b16 %v302, %v294
        %v327 = vpack.c.b16 %v303, %v295
        %v328 = vpack.c.b16 %v304, %v296
        %v329 = vpack.c.b16 %v305, %v297
        %v330 = vpack.c.b16 %v306, %v298
        %v331 = vpack.c.b16 %v307, %v299
        %v332 = vpack.c.b16 %v308, %v300
        %v333 = vpack.c.b16 %v309, %v301
        %vm358 = vcmask 392192
        %v360 = vsel %vm358, %v213, 0
        %362 = vmatpush.bf16.msra.mxu0 0
        %363 = vmatpush.bf16.msra.mxu0 0
        %364 = vmatpush.bf16.msra.mxu0 0
        %365 = vmatpush.bf16.msra.mxu0 0
        %366 = vmatpush.bf16.msra.mxu0 0
        %367 = vmatpush.bf16.msra.mxu0 %v326
        %368 = vmatpush.bf16.msra.mxu0 %v318
        %369 = vmatpush.bf16.msra.mxu0 %v310
        %370 = vmatmul.bf16.gmra.mxu0 %v360
        %v371 = vpop.f32.mrf.mxu0
        %v372 = vadd.f32 0.0, %v371
        %v373 = vpop.f32.mrf.mxu0
        %374 = vdwg.mxu0
        %375 = vmatpush.bf16.msra.mxu0 0
        %376 = vmatpush.bf16.msra.mxu0 0
        %377 = vmatpush.bf16.msra.mxu0 0
        %378 = vmatpush.bf16.msra.mxu0 0
        %379 = vmatpush.bf16.msra.mxu0 0
        %380 = vmatpush.bf16.msra.mxu0 %v327
        %381 = vmatpush.bf16.msra.mxu0 %v319
        %382 = vmatpush.bf16.msra.mxu0 %v311
        %383 = vmatmul.bf16.gmra.mxu0 %v360
        %v384 = vpop.f32.mrf.mxu0
        %v385 = vadd.f32 0.0, %v384
        %v386 = vpop.f32.mrf.mxu0
        %387 = vdwg.mxu0
        %388 = vmatpush.bf16.msra.mxu0 0
        %389 = vmatpush.bf16.msra.mxu0 0
        %390 = vmatpush.bf16.msra.mxu0 0
        %391 = vmatpush.bf16.msra.mxu0 0
        %392 = vmatpush.bf16.msra.mxu0 0
        %393 = vmatpush.bf16.msra.mxu0 %v328
        %394 = vmatpush.bf16.msra.mxu0 %v320
        %395 = vmatpush.bf16.msra.mxu0 %v312
        %396 = vmatmul.bf16.gmra.mxu0 %v360
        %v397 = vpop.f32.mrf.mxu0
        %v398 = vadd.f32 0.0, %v397
        %v399 = vpop.f32.mrf.mxu0
        %400 = vdwg.mxu0
        %401 = vmatpush.bf16.msra.mxu0 0
        %402 = vmatpush.bf16.msra.mxu0 0
        %403 = vmatpush.bf16.msra.mxu0 0
        %404 = vmatpush.bf16.msra.mxu0 0
        %405 = vmatpush.bf16.msra.mxu0 0
        %406 = vmatpush.bf16.msra.mxu0 %v329
        %407 = vmatpush.bf16.msra.mxu0 %v321
        %408 = vmatpush.bf16.msra.mxu0 %v313
        %409 = vmatmul.bf16.gmra.mxu0 %v360
        %v410 = vpop.f32.mrf.mxu0
        %v411 = vadd.f32 0.0, %v410
        %v412 = vpop.f32.mrf.mxu0
        %413 = vdwg.mxu0
        %414 = vmatpush.bf16.msra.mxu0 0
        %415 = vmatpush.bf16.msra.mxu0 0
        %416 = vmatpush.bf16.msra.mxu0 0
        %417 = vmatpush.bf16.msra.mxu0 0
        %418 = vmatpush.bf16.msra.mxu0 0
        %419 = vmatpush.bf16.msra.mxu0 %v330
        %420 = vmatpush.bf16.msra.mxu0 %v322
        %421 = vmatpush.bf16.msra.mxu0 %v314
        %422 = vmatmul.bf16.gmra.mxu0 %v360
        %v423 = vpop.f32.mrf.mxu0
        %v424 = vadd.f32 0.0, %v423
        %v425 = vpop.f32.mrf.mxu0
        %426 = vdwg.mxu0
        %427 = vmatpush.bf16.msra.mxu0 0
        %428 = vmatpush.bf16.msra.mxu0 0
        %429 = vmatpush.bf16.msra.mxu0 0
        %430 = vmatpush.bf16.msra.mxu0 0
        %431 = vmatpush.bf16.msra.mxu0 0
        %432 = vmatpush.bf16.msra.mxu0 %v331
        %433 = vmatpush.bf16.msra.mxu0 %v323
        %434 = vmatpush.bf16.msra.mxu0 %v315
        %435 = vmatmul.bf16.gmra.mxu0 %v360
        %v436 = vpop.f32.mrf.mxu0
        %v437 = vadd.f32 0.0, %v436
        %v438 = vpop.f32.mrf.mxu0
        %439 = vdwg.mxu0
        %440 = vmatpush.bf16.msra.mxu0 0
        %441 = vmatpush.bf16.msra.mxu0 0
        %442 = vmatpush.bf16.msra.mxu0 0
        %443 = vmatpush.bf16.msra.mxu0 0
        %444 = vmatpush.bf16.msra.mxu0 0
        %445 = vmatpush.bf16.msra.mxu0 %v332
        %446 = vmatpush.bf16.msra.mxu0 %v324
        %447 = vmatpush.bf16.msra.mxu0 %v316
        %448 = vmatmul.bf16.gmra.mxu0 %v360
        %v449 = vpop.f32.mrf.mxu0
        %v450 = vadd.f32 0.0, %v449
        %v451 = vpop.f32.mrf.mxu0
        %452 = vdwg.mxu0
        %453 = vmatpush.bf16.msra.mxu0 0
        %454 = vmatpush.bf16.msra.mxu0 0
        %455 = vmatpush.bf16.msra.mxu0 0
        %456 = vmatpush.bf16.msra.mxu0 0
        %457 = vmatpush.bf16.msra.mxu0 0
        %458 = vmatpush.bf16.msra.mxu0 %v333
        %459 = vmatpush.bf16.msra.mxu0 %v325
        %460 = vmatpush.bf16.msra.mxu0 %v317
        %461 = vmatmul.bf16.gmra.mxu0 %v360
        %v462 = vpop.f32.mrf.mxu0
        %v463 = vadd.f32 0.0, %v462
        %v464 = vpop.f32.mrf.mxu0
        %465 = vdwg.mxu0
        %vm466 = vcmp.ge.f32.partialorder %v372, 0.0
        %vm467 = vcmp.ge.f32.partialorder %v385, 0.0
        %vm468 = vcmp.ge.f32.partialorder %v398, 0.0
        %vm469 = vcmp.ge.f32.partialorder %v411, 0.0
        %vm470 = vcmp.ge.f32.partialorder %v424, 0.0
        %vm471 = vcmp.ge.f32.partialorder %v437, 0.0
        %vm472 = vcmp.ge.f32.partialorder %v450, 0.0
        %vm473 = vcmp.ge.f32.partialorder %v463, 0.0
        %v474 = vmul.f32 %v372, 0.2
        %v475 = vmul.f32 %v385, 0.2
        %v476 = vmul.f32 %v398, 0.2
        %v477 = vmul.f32 %v411, 0.2
        %v478 = vmul.f32 %v424, 0.2
        %v479 = vmul.f32 %v437, 0.2
        %v480 = vmul.f32 %v450, 0.2
        %v481 = vmul.f32 %v463, 0.2
        %v482 = vsel %vm466, %v372, %v474
        %v483 = vsel %vm467, %v385, %v475
        %v484 = vsel %vm468, %v398, %v476
        %v485 = vsel %vm469, %v411, %v477
        %v486 = vsel %vm470, %v424, %v478
        %v487 = vsel %vm471, %v437, %v479
        %v488 = vsel %vm472, %v450, %v480
        %v489 = vsel %vm473, %v463, %v481
        %v490 = vpack.c.bf16 %v483, %v482
        %v491 = vpack.c.bf16 %v485, %v484
        %v492 = vpack.c.bf16 %v487, %v486
        %v493 = vpack.c.bf16 %v489, %v488
        %494 = vst [vmem:[%s210] sm:$0xff] %v490
        %495 = vst [vmem:[%s210 + $0x8] sm:$0xff] %v491
        %496 = vst [vmem:[%s210 + $0x10] sm:$0xff] %v492
        %497 = vst [vmem:[%s210 + $0x18] sm:$0xff] %v493
        %s498 = smul.u32 8, %s13
        %p499 = scmp.lt.s32.totalorder %s498, 15
        %s500 = scalar_select %p499, %s498, 15
        %s501 = smul.addr %s500, 4
        %s502 = scalar_lea.vmem %s2, %s501
        // Predicated region
        $region52: #{discriminator_forward.4} parent=46 // pred_check
          %p503 = pneg %p78
        $region53: #{discriminator_forward.4} parent=46 // pred_check_branch
          %505 = sbr.rel (%p503) target = $region55
        $region54: #{discriminator_forward.4} parent=46 // pred_region
          %s506 = smul.u32 8, %s13
        $region55: #{discriminator_forward.4} parent=46 // pred_fallthru
          _
      $region47: #{discriminator_forward.4} parent=5 // pred_fallthru
        _
      %p507 = scmp.le.s32.totalorder 2, %s8
      // Predicated region
      $region56: #{discriminator_forward.4} parent=5 // pred_check
        %p508 = pneg %p507
      $region57: #{discriminator_forward.4} parent=5 // pred_check_branch
        %510 = sbr.rel (%p508) target = $region59
      $region58: #{discriminator_forward.4} parent=5 // pred_region
        %s511 = ssub.s32 %s8, 2
        // Predicated region
        $region60: #{discriminator_forward.4} parent=58 // pred_check
          %p512 = pneg %p84
        $region61: #{discriminator_forward.4} parent=58 // pred_check_branch
          %514 = sbr.rel (%p512) target = $region63
        $region62: #{discriminator_forward.4} parent=58 // pred_region
          %s515 = smul.u32 8, %s14
          %p516 = scmp.lt.s32.totalorder %s515, 15
          %s517 = scalar_select %p516, %s515, 15
          %s518 = smul.addr %s517, 4
          %s519 = scalar_lea.vmem %s2, %s518
        $region63: #{discriminator_forward.4} parent=58 // pred_fallthru
          _
      $region59: #{discriminator_forward.4} parent=5 // pred_fallthru
        _
    $region6: #{discriminator_forward.4} parent=1 // loop_footer
      %s12 = sadd.s32 1, %s8
    $region7: #{discriminator_forward.4} parent=1 // loop_footer_branch
      %7 = sbr.rel target = $region3
    $region8: #{discriminator_forward.4} parent=1 // loop_exit
      _

// kernel: discriminator_forward.5
$region0: #{discriminator_forward.5}
  #allocation0 [shape = 'u32[]', space=smem, size = 0x4, offset = 0x4, fixed_abs, tag = 'smem constant byte address 0x4 - core index']
  #allocation1 [shape = 'u32[72,128]{1,0:T(1,128)}', space=vmem, size = 0x9000, scoped, tag = 'internal scratch']
  %s0 = inlined_call_operand.vmem [shape: bf16[16,128], index: 0, kind: input, shape index: {}]
  %s1 = inlined_call_operand.vmem [shape: bf16[128,512], index: 1, kind: input, shape index: {}]
  %s2 = inlined_call_operand.vmem [shape: f32[16,1], index: 2, kind: input, shape index: {}]
  %s3 = inlined_call_operand.vmem [shape: f32[16,1], index: 3, kind: input, shape index: {}]
  %s4 = inlined_call_operand.vmem [shape: bf16[16,512], index: 4, kind: output, shape index: {}]
  %s5 = sld [smem:[#allocation0]]
  $region26: #{discriminator_forward.5} parent=0
    _
  %s7 = ssub.s32 1, %s5
  %s8 = scalar_select 0, %s7, %s5
  // Predicated region
  $region2: #{discriminator_forward.5} parent=0 // pred_check
    _
  $region3: #{discriminator_forward.5} parent=0 // pred_check_branch
    %10 = sbr.rel (0) target = $region5
  $region4: #{discriminator_forward.5} parent=0 // pred_region
    _
  $region5: #{discriminator_forward.5} parent=0 // pred_fallthru
    _
  // Predicated region
  $region6: #{discriminator_forward.5} parent=0 // pred_check
    _
  $region7: #{discriminator_forward.5} parent=0 // pred_check_branch
    %12 = sbr.rel (0) target = $region9
  $region8: #{discriminator_forward.5} parent=0 // pred_region
    _
  $region9: #{discriminator_forward.5} parent=0 // pred_fallthru
    _
  // Predicated region
  $region10: #{discriminator_forward.5} parent=0 // pred_check
    _
  $region11: #{discriminator_forward.5} parent=0 // pred_check_branch
    %14 = sbr.rel (0) target = $region13
  $region12: #{discriminator_forward.5} parent=0 // pred_region
    _
  $region13: #{discriminator_forward.5} parent=0 // pred_fallthru
    _
  // Predicated region
  $region14: #{discriminator_forward.5} parent=0 // pred_check
    _
  $region15: #{discriminator_forward.5} parent=0 // pred_check_branch
    %16 = sbr.rel (0) target = $region17
  $region16: #{discriminator_forward.5} parent=0 // pred_region
    _
  $region17: #{discriminator_forward.5} parent=0 // pred_fallthru
    _
  %v17 = vld [vmem:[%s0] sm:$0xf]
  %v18 = vld [vmem:[%s0 + $0x4] sm:$0xf]
  %v19 = vld [vmem:[%s1] sm:$0xff]
  %v20 = vld [vmem:[%s1 + $0x8] sm:$0xff]
  %v21 = vld [vmem:[%s1 + $0x10] sm:$0xff]
  %v22 = vld [vmem:[%s1 + $0x18] sm:$0xff]
  %v23 = vld [vmem:[%s1 + $0x20] sm:$0xff]
  %v24 = vld [vmem:[%s1 + $0x28] sm:$0xff]
  %v25 = vld [vmem:[%s1 + $0x30] sm:$0xff]
  %v26 = vld [vmem:[%s1 + $0x38] sm:$0xff]
  %v27 = vld [vmem:[%s1 + $0x40] sm:$0xff]
  %v28 = vld [vmem:[%s1 + $0x48] sm:$0xff]
  %v29 = vld [vmem:[%s1 + $0x50] sm:$0xff]
  %v30 = vld [vmem:[%s1 + $0x58] sm:$0xff]
  %v31 = vld [vmem:[%s1 + $0x60] sm:$0xff]
  %v32 = vld [vmem:[%s1 + $0x68] sm:$0xff]
  %v33 = vld [vmem:[%s1 + $0x70] sm:$0xff]
  %v34 = vld [vmem:[%s1 + $0x78] sm:$0xff]
  %v35 = vld [vmem:[%s1 + $0x80] sm:$0xff]
  %v36 = vld [vmem:[%s1 + $0x88] sm:$0xff]
  %v37 = vld [vmem:[%s1 + $0x90] sm:$0xff]
  %v38 = vld [vmem:[%s1 + $0x98] sm:$0xff]
  %v39 = vld [vmem:[%s1 + $0xa0] sm:$0xff]
  %v40 = vld [vmem:[%s1 + $0xa8] sm:$0xff]
  %v41 = vld [vmem:[%s1 + $0xb0] sm:$0xff]
  %v42 = vld [vmem:[%s1 + $0xb8] sm:$0xff]
  %v43 = vld [vmem:[%s1 + $0xc0] sm:$0xff]
  %v44 = vld [vmem:[%s1 + $0xc8] sm:$0xff]
  %v45 = vld [vmem:[%s1 + $0xd0] sm:$0xff]
  %v46 = vld [vmem:[%s1 + $0xd8] sm:$0xff]
  %v47 = vld [vmem:[%s1 + $0xe0] sm:$0xff]
  %v48 = vld [vmem:[%s1 + $0xe8] sm:$0xff]
  %v49 = vld [vmem:[%s1 + $0xf0] sm:$0xff]
  %v50 = vld [vmem:[%s1 + $0xf8] sm:$0xff]
  %v53 = vunpack.c.l.b16 %v17
  %v54 = vunpack.c.l.b16 %v18
  %v55 = vpack.c.b16 %v54, %v53
  %v89 = vunpack.c.l.b16 %v19
  %v90 = vunpack.c.h.b16 %v19
  %v91 = vunpack.c.l.b16 %v20
  %v92 = vunpack.c.h.b16 %v20
  %v93 = vunpack.c.l.b16 %v21
  %v94 = vunpack.c.h.b16 %v21
  %v95 = vunpack.c.l.b16 %v22
  %v96 = vunpack.c.h.b16 %v22
  %v97 = vunpack.c.l.b16 %v23
  %v98 = vunpack.c.h.b16 %v23
  %v99 = vunpack.c.l.b16 %v24
  %v100 = vunpack.c.h.b16 %v24
  %v101 = vunpack.c.l.b16 %v25
  %v102 = vunpack.c.h.b16 %v25
  %v103 = vunpack.c.l.b16 %v26
  %v104 = vunpack.c.h.b16 %v26
  %v105 = vunpack.c.l.b16 %v27
  %v106 = vunpack.c.h.b16 %v27
  %v107 = vunpack.c.l.b16 %v28
  %v108 = vunpack.c.h.b16 %v28
  %v109 = vunpack.c.l.b16 %v29
  %v110 = vunpack.c.h.b16 %v29
  %v111 = vunpack.c.l.b16 %v30
  %v112 = vunpack.c.h.b16 %v30
  %v113 = vunpack.c.l.b16 %v31
  %v114 = vunpack.c.h.b16 %v31
  %v115 = vunpack.c.l.b16 %v32
  %v116 = vunpack.c.h.b16 %v32
  %v117 = vunpack.c.l.b16 %v33
  %v118 = vunpack.c.h.b16 %v33
  %v119 = vunpack.c.l.b16 %v34
  %v120 = vunpack.c.h.b16 %v34
  %v121 = vunpack.c.l.b16 %v35
  %v122 = vunpack.c.h.b16 %v35
  %v123 = vunpack.c.l.b16 %v36
  %v124 = vunpack.c.h.b16 %v36
  %v125 = vunpack.c.l.b16 %v37
  %v126 = vunpack.c.h.b16 %v37
  %v127 = vunpack.c.l.b16 %v38
  %v128 = vunpack.c.h.b16 %v38
  %v129 = vunpack.c.l.b16 %v39
  %v130 = vunpack.c.h.b16 %v39
  %v131 = vunpack.c.l.b16 %v40
  %v132 = vunpack.c.h.b16 %v40
  %v133 = vunpack.c.l.b16 %v41
  %v134 = vunpack.c.h.b16 %v41
  %v135 = vunpack.c.l.b16 %v42
  %v136 = vunpack.c.h.b16 %v42
  %v137 = vunpack.c.l.b16 %v43
  %v138 = vunpack.c.h.b16 %v43
  %v139 = vunpack.c.l.b16 %v44
  %v140 = vunpack.c.h.b16 %v44
  %v141 = vunpack.c.l.b16 %v45
  %v142 = vunpack.c.h.b16 %v45
  %v143 = vunpack.c.l.b16 %v46
  %v144 = vunpack.c.h.b16 %v46
  %v145 = vunpack.c.l.b16 %v47
  %v146 = vunpack.c.h.b16 %v47
  %v147 = vunpack.c.l.b16 %v48
  %v148 = vunpack.c.h.b16 %v48
  %v149 = vunpack.c.l.b16 %v49
  %v150 = vunpack.c.h.b16 %v49
  %v151 = vunpack.c.l.b16 %v50
  %v152 = vunpack.c.h.b16 %v50
  %v153 = vpack.c.b16 %v93, %v89
  %v154 = vpack.c.b16 %v94, %v90
  %v155 = vpack.c.b16 %v95, %v91
  %v156 = vpack.c.b16 %v96, %v92
  %v157 = vpack.c.b16 %v101, %v97
  %v158 = vpack.c.b16 %v102, %v98
  %v159 = vpack.c.b16 %v103, %v99
  %v160 = vpack.c.b16 %v104, %v100
  %v161 = vpack.c.b16 %v109, %v105
  %v162 = vpack.c.b16 %v110, %v106
  %v163 = vpack.c.b16 %v111, %v107
  %v164 = vpack.c.b16 %v112, %v108
  %v165 = vpack.c.b16 %v117, %v113
  %v166 = vpack.c.b16 %v118, %v114
  %v167 = vpack.c.b16 %v119, %v115
  %v168 = vpack.c.b16 %v120, %v116
  %v169 = vpack.c.b16 %v125, %v121
  %v170 = vpack.c.b16 %v126, %v122
  %v171 = vpack.c.b16 %v127, %v123
  %v172 = vpack.c.b16 %v128, %v124
  %v173 = vpack.c.b16 %v133, %v129
  %v174 = vpack.c.b16 %v134, %v130
  %v175 = vpack.c.b16 %v135, %v131
  %v176 = vpack.c.b16 %v136, %v132
  %v177 = vpack.c.b16 %v141, %v137
  %v178 = vpack.c.b16 %v142, %v138
  %v179 = vpack.c.b16 %v143, %v139
  %v180 = vpack.c.b16 %v144, %v140
  %v181 = vpack.c.b16 %v149, %v145
  %v182 = vpack.c.b16 %v150, %v146
  %v183 = vpack.c.b16 %v151, %v147
  %v184 = vpack.c.b16 %v152, %v148
  %217 = vmatpush.bf16.msra.mxu0 %v181
  %218 = vmatpush.bf16.msra.mxu0 %v177
  %219 = vmatpush.bf16.msra.mxu0 %v173
  %220 = vmatpush.bf16.msra.mxu0 %v169
  %221 = vmatpush.bf16.msra.mxu0 %v165
  %222 = vmatpush.bf16.msra.mxu0 %v161
  %223 = vmatpush.bf16.msra.mxu0 %v157
  %224 = vmatpush.bf16.msra.mxu0 %v153
  %225 = vmatmul.bf16.gmra.mxu0 %v55
  %v226 = vpop.f32.mrf.mxu0
  %v227 = vadd.f32 0.0, %v226
  %v228 = vpop.f32.mrf.mxu0
  %v229 = vadd.f32 0.0, %v228
  %230 = vdwg.mxu0
  %231 = vmatpush.bf16.msra.mxu0 %v182
  %232 = vmatpush.bf16.msra.mxu0 %v178
  %233 = vmatpush.bf16.msra.mxu0 %v174
  %234 = vmatpush.bf16.msra.mxu0 %v170
  %235 = vmatpush.bf16.msra.mxu0 %v166
  %236 = vmatpush.bf16.msra.mxu0 %v162
  %237 = vmatpush.bf16.msra.mxu0 %v158
  %238 = vmatpush.bf16.msra.mxu0 %v154
  %239 = vmatmul.bf16.gmra.mxu0 %v55
  %v240 = vpop.f32.mrf.mxu0
  %v241 = vadd.f32 0.0, %v240
  %v242 = vpop.f32.mrf.mxu0
  %v243 = vadd.f32 0.0, %v242
  %244 = vdwg.mxu0
  %245 = vmatpush.bf16.msra.mxu0 %v183
  %246 = vmatpush.bf16.msra.mxu0 %v179
  %247 = vmatpush.bf16.msra.mxu0 %v175
  %248 = vmatpush.bf16.msra.mxu0 %v171
  %249 = vmatpush.bf16.msra.mxu0 %v167
  %250 = vmatpush.bf16.msra.mxu0 %v163
  %251 = vmatpush.bf16.msra.mxu0 %v159
  %252 = vmatpush.bf16.msra.mxu0 %v155
  %253 = vmatmul.bf16.gmra.mxu0 %v55
  %v254 = vpop.f32.mrf.mxu0
  %v255 = vadd.f32 0.0, %v254
  %v256 = vpop.f32.mrf.mxu0
  %v257 = vadd.f32 0.0, %v256
  %258 = vdwg.mxu0
  %259 = vmatpush.bf16.msra.mxu0 %v184
  %260 = vmatpush.bf16.msra.mxu0 %v180
  %261 = vmatpush.bf16.msra.mxu0 %v176
  %262 = vmatpush.bf16.msra.mxu0 %v172
  %263 = vmatpush.bf16.msra.mxu0 %v168
  %264 = vmatpush.bf16.msra.mxu0 %v164
  %265 = vmatpush.bf16.msra.mxu0 %v160
  %266 = vmatpush.bf16.msra.mxu0 %v156
  %267 = vmatmul.bf16.gmra.mxu0 %v55
  %v268 = vpop.f32.mrf.mxu0
  %v269 = vadd.f32 0.0, %v268
  %v270 = vpop.f32.mrf.mxu0
  %v271 = vadd.f32 0.0, %v270
  %272 = vdwg.mxu0
  %v273 = vadd.f32 %v227, %v241
  %v274 = vadd.f32 %v273, %v255
  %v275 = vadd.f32 %v274, %v269
  %276 = vadd.xlane.f32.xlu0 %v275
  %v277 = vpop.xlane.xlu0 %276
  %v278 = vadd.f32 %v229, %v243
  %v279 = vadd.f32 %v278, %v257
  %v280 = vadd.f32 %v279, %v271
  %281 = vadd.xlane.f32.xlu0 %v280
  %v282 = vpop.xlane.xlu0 %281
  %v283 = vrcp.pop 512.0
  %v284 = vmul.f32 512.0, %v283
  %v285 = vsub.f32 1.0, %v284
  %v286 = vmul.f32 %v283, %v285
  %v287 = vadd.f32 %v283, %v286
  %vm288 = vweird.f32 %v283
  %v289 = vsel %vm288, %v283, %v287
  %v290 = vmul.f32 %v277, %v289
  %v291 = vmul.f32 %v282, %v289
  %v292 = vmul.f32 %v227, %v227
  %v293 = vmul.f32 %v241, %v241
  %v294 = vmul.f32 %v255, %v255
  %v295 = vmul.f32 %v269, %v269
  %v296 = vmul.f32 %v229, %v229
  %v297 = vmul.f32 %v243, %v243
  %v298 = vmul.f32 %v257, %v257
  %v299 = vmul.f32 %v271, %v271
  %v300 = vadd.f32 %v292, %v293
  %v301 = vadd.f32 %v300, %v294
  %v302 = vadd.f32 %v301, %v295
  %303 = vadd.xlane.f32.xlu0 %v302
  %v304 = vpop.xlane.xlu0 %303
  %v305 = vadd.f32 %v296, %v297
  %v306 = vadd.f32 %v305, %v298
  %v307 = vadd.f32 %v306, %v299
  %308 = vadd.xlane.f32.xlu0 %v307
  %v309 = vpop.xlane.xlu0 %308
  %v310 = vmul.f32 %v304, %v289
  %v311 = vmul.f32 %v309, %v289
  %v312 = vmul.f32 %v290, %v290
  %v313 = vmul.f32 %v291, %v291
  %v314 = vsub.f32 %v310, %v312
  %v315 = vsub.f32 %v311, %v313
  %v316 = vld [vmem:[%s2] sm:$0xff]
  %v317 = vld [vmem:[%s2 + $0x8] sm:$0xff]
  %v318 = vadd.f32 %v314, 1e-05
  %v319 = vadd.f32 %v315, 1e-05
  %v320 = vrsqrt.pop %v318
  %v321 = vmul.f32 %v320, %v318
  %v322 = vmul.f32 %v321, %v320
  %v323 = vmul.f32 0.5, %v322
  %v324 = vsub.f32 1.5, %v323
  %v325 = vmul.f32 %v320, %v324
  %vm326 = vweird.f32 %v318
  %vm327 = vweird.f32 %v320
  %vm328 = vmor %vm326, %vm327
  %v329 = vsel %vm328, %v320, %v325
  %v330 = vrsqrt.pop %v319
  %v331 = vmul.f32 %v330, %v319
  %v332 = vmul.f32 %v331, %v330
  %v333 = vmul.f32 0.5, %v332
  %v334 = vsub.f32 1.5, %v333
  %v335 = vmul.f32 %v330, %v334
  %vm336 = vweird.f32 %v319
  %vm337 = vweird.f32 %v330
  %vm338 = vmor %vm336, %vm337
  %v339 = vsel %vm338, %v330, %v335
  %v340 = vmul.f32 %v316, %v329
  %v341 = vmul.f32 %v317, %v339
  %v342 = vld [vmem:[%s3] sm:$0xff]
  %v343 = vld [vmem:[%s3 + $0x8] sm:$0xff]
  %v344 = vmul.f32 %v290, %v340
  %v345 = vmul.f32 %v291, %v341
  %v346 = vsub.f32 %v342, %v344
  %v347 = vsub.f32 %v343, %v345
  %349 = vset.pattern.permute.xlu0 0
  %350 = vperm.xlu0 %349, %v340
  %v351 = vpop.permute.xlu0 %350
  %354 = vset.pattern.permute.xlu0 0
  %355 = vperm.xlu0 %354, %v341
  %v356 = vpop.permute.xlu0 %355
  %v358 = vmul.f32 %v227, %v351
  %v359 = vmul.f32 %v241, %v351
  %v360 = vmul.f32 %v255, %v351
  %v361 = vmul.f32 %v269, %v351
  %v362 = vmul.f32 %v229, %v356
  %v363 = vmul.f32 %v243, %v356
  %v364 = vmul.f32 %v257, %v356
  %v365 = vmul.f32 %v271, %v356
  %367 = vset.pattern.permute.xlu0 0
  %368 = vperm.xlu0 %367, %v346
  %v369 = vpop.permute.xlu0 %368
  %372 = vset.pattern.permute.xlu0 0
  %373 = vperm.xlu0 %372, %v347
  %v374 = vpop.permute.xlu0 %373
  %v376 = vadd.f32 %v358, %v369
  %v377 = vadd.f32 %v359, %v369
  %v378 = vadd.f32 %v360, %v369
  %v379 = vadd.f32 %v361, %v369
  %v380 = vadd.f32 %v362, %v374
  %v381 = vadd.f32 %v363, %v374
  %v382 = vadd.f32 %v364, %v374
  %v383 = vadd.f32 %v365, %v374
  %vm384 = vcmp.ge.f32.partialorder %v376, 0.0
  %vm385 = vcmp.ge.f32.partialorder %v377, 0.0
  %vm386 = vcmp.ge.f32.partialorder %v378, 0.0
  %vm387 = vcmp.ge.f32.partialorder %v379, 0.0
  %vm388 = vcmp.ge.f32.partialorder %v380, 0.0
  %vm389 = vcmp.ge.f32.partialorder %v381, 0.0
  %vm390 = vcmp.ge.f32.partialorder %v382, 0.0
  %vm391 = vcmp.ge.f32.partialorder %v383, 0.0
  %v392 = vmul.f32 %v376, 0.2
  %v393 = vmul.f32 %v377, 0.2
  %v394 = vmul.f32 %v378, 0.2
  %v395 = vmul.f32 %v379, 0.2
  %v396 = vmul.f32 %v380, 0.2
  %v397 = vmul.f32 %v381, 0.2
  %v398 = vmul.f32 %v382, 0.2
  %v399 = vmul.f32 %v383, 0.2
  %v400 = vsel %vm384, %v376, %v392
  %v401 = vsel %vm385, %v377, %v393
  %v402 = vsel %vm386, %v378, %v394
  %v403 = vsel %vm387, %v379, %v395
  %v404 = vsel %vm388, %v380, %v396
  %v405 = vsel %vm389, %v381, %v397
  %v406 = vsel %vm390, %v382, %v398
  %v407 = vsel %vm391, %v383, %v399
  %v408 = vpack.c.bf16 %v401, %v400
  %v409 = vpack.c.bf16 %v403, %v402
  %v410 = vpack.c.bf16 %v405, %v404
  %v411 = vpack.c.bf16 %v407, %v406
  %412 = vst [vmem:[%s4] sm:$0xff] %v408
  %413 = vst [vmem:[%s4 + $0x8] sm:$0xff] %v409
  %414 = vst [vmem:[%s4 + $0x10] sm:$0xff] %v410
  %415 = vst [vmem:[%s4 + $0x18] sm:$0xff] %v411
  // Predicated region
  $region18: #{discriminator_forward.5} parent=0 // pred_check
    _
  $region19: #{discriminator_forward.5} parent=0 // pred_check_branch
    %417 = sbr.rel (0) target = $region21
  $region20: #{discriminator_forward.5} parent=0 // pred_region
    _
  $region21: #{discriminator_forward.5} parent=0 // pred_fallthru
    _
  // Predicated region
  $region22: #{discriminator_forward.5} parent=0 // pred_check
    _
  $region23: #{discriminator_forward.5} parent=0 // pred_check_branch
    %419 = sbr.rel (0) target = $region25
  $region24: #{discriminator_forward.5} parent=0 // pred_region
    _
  $region25: #{discriminator_forward.5} parent=0 // pred_fallthru
    _

// kernel: discriminator_forward.6
$region0: #{discriminator_forward.6}
  #allocation0 [shape = 'u32[]', space=smem, size = 0x4, offset = 0x4, fixed_abs, tag = 'smem constant byte address 0x4 - core index']
  #allocation1 [shape = 'u32[72,128]{1,0:T(1,128)}', space=vmem, size = 0x9000, scoped, tag = 'internal scratch']
  %s0 = inlined_call_operand.vmem [shape: bf16[32,256], index: 0, kind: input, shape index: {}]
  %s1 = inlined_call_operand.vmem [shape: bf16[256,128], index: 1, kind: input, shape index: {}]
  %s2 = inlined_call_operand.vmem [shape: f32[32,1], index: 2, kind: input, shape index: {}]
  %s3 = inlined_call_operand.vmem [shape: f32[32,1], index: 3, kind: input, shape index: {}]
  %s4 = inlined_call_operand.vmem [shape: bf16[32,128], index: 4, kind: output, shape index: {}]
  %s5 = sld [smem:[#allocation0]]
  $region26: #{discriminator_forward.6} parent=0
    _
  %s7 = ssub.s32 1, %s5
  %s8 = scalar_select 0, %s7, %s5
  // Predicated region
  $region2: #{discriminator_forward.6} parent=0 // pred_check
    _
  $region3: #{discriminator_forward.6} parent=0 // pred_check_branch
    %10 = sbr.rel (0) target = $region5
  $region4: #{discriminator_forward.6} parent=0 // pred_region
    _
  $region5: #{discriminator_forward.6} parent=0 // pred_fallthru
    _
  // Predicated region
  $region6: #{discriminator_forward.6} parent=0 // pred_check
    _
  $region7: #{discriminator_forward.6} parent=0 // pred_check_branch
    %12 = sbr.rel (0) target = $region9
  $region8: #{discriminator_forward.6} parent=0 // pred_region
    _
  $region9: #{discriminator_forward.6} parent=0 // pred_fallthru
    _
  // Predicated region
  $region10: #{discriminator_forward.6} parent=0 // pred_check
    _
  $region11: #{discriminator_forward.6} parent=0 // pred_check_branch
    %14 = sbr.rel (0) target = $region13
  $region12: #{discriminator_forward.6} parent=0 // pred_region
    _
  $region13: #{discriminator_forward.6} parent=0 // pred_fallthru
    _
  // Predicated region
  $region14: #{discriminator_forward.6} parent=0 // pred_check
    _
  $region15: #{discriminator_forward.6} parent=0 // pred_check_branch
    %16 = sbr.rel (0) target = $region17
  $region16: #{discriminator_forward.6} parent=0 // pred_region
    _
  $region17: #{discriminator_forward.6} parent=0 // pred_fallthru
    _
  %v17 = vld [vmem:[%s0] sm:$0xff]
  %v18 = vld [vmem:[%s0 + $0x8] sm:$0xff]
  %v19 = vld [vmem:[%s0 + $0x10] sm:$0xff]
  %v20 = vld [vmem:[%s0 + $0x18] sm:$0xff]
  %v21 = vld [vmem:[%s1] sm:$0xf]
  %v22 = vld [vmem:[%s1 + $0x4] sm:$0xf]
  %v23 = vld [vmem:[%s1 + $0x8] sm:$0xf]
  %v24 = vld [vmem:[%s1 + $0xc] sm:$0xf]
  %v25 = vld [vmem:[%s1 + $0x10] sm:$0xf]
  %v26 = vld [vmem:[%s1 + $0x14] sm:$0xf]
  %v27 = vld [vmem:[%s1 + $0x18] sm:$0xf]
  %v28 = vld [vmem:[%s1 + $0x1c] sm:$0xf]
  %v29 = vld [vmem:[%s1 + $0x20] sm:$0xf]
  %v30 = vld [vmem:[%s1 + $0x24] sm:$0xf]
  %v31 = vld [vmem:[%s1 + $0x28] sm:$0xf]
  %v32 = vld [vmem:[%s1 + $0x2c] sm:$0xf]
  %v33 = vld [vmem:[%s1 + $0x30] sm:$0xf]
  %v34 = vld [vmem:[%s1 + $0x34] sm:$0xf]
  %v35 = vld [vmem:[%s1 + $0x38] sm:$0xf]
  %v36 = vld [vmem:[%s1 + $0x3c] sm:$0xf]
  %v37 = vld [vmem:[%s1 + $0x40] sm:$0xf]
  %v38 = vld [vmem:[%s1 + $0x44] sm:$0xf]
  %v39 = vld [vmem:[%s1 + $0x48] sm:$0xf]
  %v40 = vld [vmem:[%s1 + $0x4c] sm:$0xf]
  %v41 = vld [vmem:[%s1 + $0x50] sm:$0xf]
  %v42 = vld [vmem:[%s1 + $0x54] sm:$0xf]
  %v43 = vld [vmem:[%s1 + $0x58] sm:$0xf]
  %v44 = vld [vmem:[%s1 + $0x5c] sm:$0xf]
  %v45 = vld [vmem:[%s1 + $0x60] sm:$0xf]
  %v46 = vld [vmem:[%s1 + $0x64] sm:$0xf]
  %v47 = vld [vmem:[%s1 + $0x68] sm:$0xf]
  %v48 = vld [vmem:[%s1 + $0x6c] sm:$0xf]
  %v49 = vld [vmem:[%s1 + $0x70] sm:$0xf]
  %v50 = vld [vmem:[%s1 + $0x74] sm:$0xf]
  %v51 = vld [vmem:[%s1 + $0x78] sm:$0xf]
  %v52 = vld [vmem:[%s1 + $0x7c] sm:$0xf]
  %v57 = vunpack.c.l.b16 %v17
  %v58 = vunpack.c.h.b16 %v17
  %v59 = vunpack.c.l.b16 %v18
  %v60 = vunpack.c.h.b16 %v18
  %v61 = vunpack.c.l.b16 %v19
  %v62 = vunpack.c.h.b16 %v19
  %v63 = vunpack.c.l.b16 %v20
  %v64 = vunpack.c.h.b16 %v20
  %v65 = vpack.c.b16 %v59, %v57
  %v66 = vpack.c.b16 %v60, %v58
  %v67 = vpack.c.b16 %v63, %v61
  %v68 = vpack.c.b16 %v64, %v62
  %v105 = vunpack.c.l.b16 %v21
  %v106 = vunpack.c.l.b16 %v22
  %v107 = vunpack.c.l.b16 %v23
  %v108 = vunpack.c.l.b16 %v24
  %v109 = vunpack.c.l.b16 %v25
  %v110 = vunpack.c.l.b16 %v26
  %v111 = vunpack.c.l.b16 %v27
  %v112 = vunpack.c.l.b16 %v28
  %v113 = vunpack.c.l.b16 %v29
  %v114 = vunpack.c.l.b16 %v30
  %v115 = vunpack.c.l.b16 %v31
  %v116 = vunpack.c.l.b16 %v32
  %v117 = vunpack.c.l.b16 %v33
  %v118 = vunpack.c.l.b16 %v34
  %v119 = vunpack.c.l.b16 %v35
  %v120 = vunpack.c.l.b16 %v36
  %v121 = vunpack.c.l.b16 %v37
  %v122 = vunpack.c.l.b16 %v38
  %v123 = vunpack.c.l.b16 %v39
  %v124 = vunpack.c.l.b16 %v40
  %v125 = vunpack.c.l.b16 %v41
  %v126 = vunpack.c.l.b16 %v42
  %v127 = vunpack.c.l.b16 %v43
  %v128 = vunpack.c.l.b16 %v44
  %v129 = vunpack.c.l.b16 %v45
  %v130 = vunpack.c.l.b16 %v46
  %v131 = vunpack.c.l.b16 %v47
  %v132 = vunpack.c.l.b16 %v48
  %v133 = vunpack.c.l.b16 %v49
  %v134 = vunpack.c.l.b16 %v50
  %v135 = vunpack.c.l.b16 %v51
  %v136 = vunpack.c.l.b16 %v52
  %v137 = vpack.c.b16 %v106, %v105
  %v138 = vpack.c.b16 %v108, %v107
  %v139 = vpack.c.b16 %v110, %v109
  %v140 = vpack.c.b16 %v112, %v111
  %v141 = vpack.c.b16 %v114, %v113
  %v142 = vpack.c.b16 %v116, %v115
  %v143 = vpack.c.b16 %v118, %v117
  %v144 = vpack.c.b16 %v120, %v119
  %v145 = vpack.c.b16 %v122, %v121
  %v146 = vpack.c.b16 %v124, %v123
  %v147 = vpack.c.b16 %v126, %v125
  %v148 = vpack.c.b16 %v128, %v127
  %v149 = vpack.c.b16 %v130, %v129
  %v150 = vpack.c.b16 %v132, %v131
  %v151 = vpack.c.b16 %v134, %v133
  %v152 = vpack.c.b16 %v136, %v135
  %169 = vmatpush.bf16.msra.mxu0 %v144
  %170 = vmatpush.bf16.msra.mxu0 %v143
  %171 = vmatpush.bf16.msra.mxu0 %v142
  %172 = vmatpush.bf16.msra.mxu0 %v141
  %173 = vmatpush.bf16.msra.mxu0 %v140
  %174 = vmatpush.bf16.msra.mxu0 %v139
  %175 = vmatpush.bf16.msra.mxu0 %v138
  %176 = vmatpush.bf16.msra.mxu0 %v137
  %177 = vmatmul.bf16.gmra.mxu0 %v65
  %v178 = vpop.f32.mrf.mxu0
  %v179 = vadd.f32 0.0, %v178
  %v180 = vpop.f32.mrf.mxu0
  %v181 = vadd.f32 0.0, %v180
  %182 = vmatmul.bf16.gmra.mxu0 %v67
  %v183 = vpop.f32.mrf.mxu0
  %v184 = vadd.f32 0.0, %v183
  %v185 = vpop.f32.mrf.mxu0
  %v186 = vadd.f32 0.0, %v185
  %187 = vdwg.mxu0
  %188 = vmatpush.bf16.msra.mxu0 %v152
  %189 = vmatpush.bf16.msra.mxu0 %v151
  %190 = vmatpush.bf16.msra.mxu0 %v150
  %191 = vmatpush.bf16.msra.mxu0 %v149
  %192 = vmatpush.bf16.msra.mxu0 %v148
  %193 = vmatpush.bf16.msra.mxu0 %v147
  %194 = vmatpush.bf16.msra.mxu0 %v146
  %195 = vmatpush.bf16.msra.mxu0 %v145
  %196 = vmatmul.bf16.gmra.mxu0 %v66
  %v197 = vpop.f32.mrf.mxu0
  %v198 = vadd.f32 %v179, %v197
  %v199 = vpop.f32.mrf.mxu0
  %v200 = vadd.f32 %v181, %v199
  %201 = vmatmul.bf16.gmra.mxu0 %v68
  %v202 = vpop.f32.mrf.mxu0
  %v203 = vadd.f32 %v184, %v202
  %v204 = vpop.f32.mrf.mxu0
  %v205 = vadd.f32 %v186, %v204
  %206 = vdwg.mxu0
  %207 = vadd.xlane.f32.xlu0 %v198
  %v208 = vpop.xlane.xlu0 %207
  %209 = vadd.xlane.f32.xlu0 %v200
  %v210 = vpop.xlane.xlu0 %209
  %211 = vadd.xlane.f32.xlu0 %v203
  %v212 = vpop.xlane.xlu0 %211
  %213 = vadd.xlane.f32.xlu0 %v205
  %v214 = vpop.xlane.xlu0 %213
  %v215 = vrcp.pop 128.0
  %v216 = vmul.f32 128.0, %v215
  %v217 = vsub.f32 1.0, %v216
  %v218 = vmul.f32 %v215, %v217
  %v219 = vadd.f32 %v215, %v218
  %vm220 = vweird.f32 %v215
  %v221 = vsel %vm220, %v215, %v219
  %v222 = vmul.f32 %v208, %v221
  %v223 = vmul.f32 %v210, %v221
  %v224 = vmul.f32 %v212, %v221
  %v225 = vmul.f32 %v214, %v221
  %v226 = vmul.f32 %v198, %v198
  %v227 = vmul.f32 %v200, %v200
  %v228 = vmul.f32 %v203, %v203
  %v229 = vmul.f32 %v205, %v205
  %230 = vadd.xlane.f32.xlu0 %v226
  %v231 = vpop.xlane.xlu0 %230
  %232 = vadd.xlane.f32.xlu0 %v227
  %v233 = vpop.xlane.xlu0 %232
  %234 = vadd.xlane.f32.xlu0 %v228
  %v235 = vpop.xlane.xlu0 %234
  %236 = vadd.xlane.f32.xlu0 %v229
  %v237 = vpop.xlane.xlu0 %236
  %v238 = vmul.f32 %v231, %v221
  %v239 = vmul.f32 %v233, %v221
  %v240 = vmul.f32 %v235, %v221
  %v241 = vmul.f32 %v237, %v221
  %v242 = vmul.f32 %v222, %v222
  %v243 = vmul.f32 %v223, %v223
  %v244 = vmul.f32 %v224, %v224
  %v245 = vmul.f32 %v225, %v225
  %v246 = vsub.f32 %v238, %v242
  %v247 = vsub.f32 %v239, %v243
  %v248 = vsub.f32 %v240, %v244
  %v249 = vsub.f32 %v241, %v245
  %v250 = vld [vmem:[%s2] sm:$0xff]
  %v251 = vld [vmem:[%s2 + $0x8] sm:$0xff]
  %v252 = vld [vmem:[%s2 + $0x10] sm:$0xff]
  %v253 = vld [vmem:[%s2 + $0x18] sm:$0xff]
  %v254 = vadd.f32 %v246, 1e-05
  %v255 = vadd.f32 %v247, 1e-05
  %v256 = vadd.f32 %v248, 1e-05
  %v257 = vadd.f32 %v249, 1e-05
  %v258 = vrsqrt.pop %v254
  %v259 = vmul.f32 %v258, %v254
  %v260 = vmul.f32 %v259, %v258
  %v261 = vmul.f32 0.5, %v260
  %v262 = vsub.f32 1.5, %v261
  %v263 = vmul.f32 %v258, %v262
  %vm264 = vweird.f32 %v254
  %vm265 = vweird.f32 %v258
  %vm266 = vmor %vm264, %vm265
  %v267 = vsel %vm266, %v258, %v263
  %v268 = vrsqrt.pop %v255
  %v269 = vmul.f32 %v268, %v255
  %v270 = vmul.f32 %v269, %v268
  %v271 = vmul.f32 0.5, %v270
  %v272 = vsub.f32 1.5, %v271
  %v273 = vmul.f32 %v268, %v272
  %vm274 = vweird.f32 %v255
  %vm275 = vweird.f32 %v268
  %vm276 = vmor %vm274, %vm275
  %v277 = vsel %vm276, %v268, %v273
  %v278 = vrsqrt.pop %v256
  %v279 = vmul.f32 %v278, %v256
  %v280 = vmul.f32 %v279, %v278
  %v281 = vmul.f32 0.5, %v280
  %v282 = vsub.f32 1.5, %v281
  %v283 = vmul.f32 %v278, %v282
  %vm284 = vweird.f32 %v256
  %vm285 = vweird.f32 %v278
  %vm286 = vmor %vm284, %vm285
  %v287 = vsel %vm286, %v278, %v283
  %v288 = vrsqrt.pop %v257
  %v289 = vmul.f32 %v288, %v257
  %v290 = vmul.f32 %v289, %v288
  %v291 = vmul.f32 0.5, %v290
  %v292 = vsub.f32 1.5, %v291
  %v293 = vmul.f32 %v288, %v292
  %vm294 = vweird.f32 %v257
  %vm295 = vweird.f32 %v288
  %vm296 = vmor %vm294, %vm295
  %v297 = vsel %vm296, %v288, %v293
  %v298 = vmul.f32 %v250, %v267
  %v299 = vmul.f32 %v251, %v277
  %v300 = vmul.f32 %v252, %v287
  %v301 = vmul.f32 %v253, %v297
  %v302 = vld [vmem:[%s3] sm:$0xff]
  %v303 = vld [vmem:[%s3 + $0x8] sm:$0xff]
  %v304 = vld [vmem:[%s3 + $0x10] sm:$0xff]
  %v305 = vld [vmem:[%s3 + $0x18] sm:$0xff]
  %v306 = vmul.f32 %v222, %v298
  %v307 = vmul.f32 %v223, %v299
  %v308 = vmul.f32 %v224, %v300
  %v309 = vmul.f32 %v225, %v301
  %v310 = vsub.f32 %v302, %v306
  %v311 = vsub.f32 %v303, %v307
  %v312 = vsub.f32 %v304, %v308
  %v313 = vsub.f32 %v305, %v309
  %315 = vset.pattern.permute.xlu0 0
  %316 = vperm.xlu0 %315, %v298
  %v317 = vpop.permute.xlu0 %316
  %320 = vset.pattern.permute.xlu0 0
  %321 = vperm.xlu0 %320, %v299
  %v322 = vpop.permute.xlu0 %321
  %325 = vset.pattern.permute.xlu0 0
  %326 = vperm.xlu0 %325, %v300
  %v327 = vpop.permute.xlu0 %326
  %330 = vset.pattern.permute.xlu0 0
  %331 = vperm.xlu0 %330, %v301
  %v332 = vpop.permute.xlu0 %331
  %v334 = vmul.f32 %v198, %v317
  %v335 = vmul.f32 %v200, %v322
  %v336 = vmul.f32 %v203, %v327
  %v337 = vmul.f32 %v205, %v332
  %339 = vset.pattern.permute.xlu0 0
  %340 = vperm.xlu0 %339, %v310
  %v341 = vpop.permute.xlu0 %340
  %344 = vset.pattern.permute.xlu0 0
  %345 = vperm.xlu0 %344, %v311
  %v346 = vpop.permute.xlu0 %345
  %349 = vset.pattern.permute.xlu0 0
  %350 = vperm.xlu0 %349, %v312
  %v351 = vpop.permute.xlu0 %350
  %354 = vset.pattern.permute.xlu0 0
  %355 = vperm.xlu0 %354, %v313
  %v356 = vpop.permute.xlu0 %355
  %v358 = vadd.f32 %v334, %v341
  %v359 = vadd.f32 %v335, %v346
  %v360 = vadd.f32 %v336, %v351
  %v361 = vadd.f32 %v337, %v356
  %vm362 = vcmp.ge.f32.partialorder %v358, 0.0
  %vm363 = vcmp.ge.f32.partialorder %v359, 0.0
  %vm364 = vcmp.ge.f32.partialorder %v360, 0.0
  %vm365 = vcmp.ge.f32.partialorder %v361, 0.0
  %v366 = vmul.f32 %v358, 0.2
  %v367 = vmul.f32 %v359, 0.2
  %v368 = vmul.f32 %v360, 0.2
  %v369 = vmul.f32 %v361, 0.2
  %v370 = vsel %vm362, %v358, %v366
  %v371 = vsel %vm363, %v359, %v367
  %v372 = vsel %vm364, %v360, %v368
  %v373 = vsel %vm365, %v361, %v369
  %v374 = vpack.c.bf16 %v370, %v370
  %v375 = vpack.c.bf16 %v371, %v371
  %v376 = vpack.c.bf16 %v372, %v372
  %v377 = vpack.c.bf16 %v373, %v373
  %378 = vst [vmem:[%s4] sm:$0xf] %v374
  %379 = vst [vmem:[%s4 + $0x4] sm:$0xf] %v375
  %380 = vst [vmem:[%s4 + $0x8] sm:$0xf] %v376
  %381 = vst [vmem:[%s4 + $0xc] sm:$0xf] %v377
  // Predicated region
  $region18: #{discriminator_forward.6} parent=0 // pred_check
    _
  $region19: #{discriminator_forward.6} parent=0 // pred_check_branch
    %383 = sbr.rel (0) target = $region21
  $region20: #{discriminator_forward.6} parent=0 // pred_region
    _
  $region21: #{discriminator_forward.6} parent=0 // pred_fallthru
    _
  // Predicated region
  $region22: #{discriminator_forward.6} parent=0 // pred_check
    _
  $region23: #{discriminator_forward.6} parent=0 // pred_check_branch
    %385 = sbr.rel (0) target = $region25
  $region24: #{discriminator_forward.6} parent=0 // pred_region
    _
  $region25: #{discriminator_forward.6} parent=0 // pred_fallthru
    _

// kernel: discriminator_forward.7
$region0: #{discriminator_forward.7}
  #allocation0 [shape = 'u32[]', space=smem, size = 0x4, offset = 0x4, fixed_abs, tag = 'smem constant byte address 0x4 - core index']
  #allocation1 [shape = 'u32[72,128]{1,0:T(1,128)}', space=vmem, size = 0x9000, scoped, tag = 'internal scratch']
  %s0 = inlined_call_operand.vmem [shape: bf16[64,512], index: 0, kind: input, shape index: {}]
  %s1 = inlined_call_operand.vmem [shape: bf16[512,32], index: 1, kind: input, shape index: {}]
  %s2 = inlined_call_operand.vmem [shape: f32[64,1], index: 2, kind: input, shape index: {}]
  %s3 = inlined_call_operand.vmem [shape: f32[64,1], index: 3, kind: input, shape index: {}]
  %s4 = inlined_call_operand.vmem [shape: f32[64,16], index: 4, kind: input, shape index: {}]
  %s5 = inlined_call_operand.hbm [shape: f32[1,2], index: 5, kind: output, shape index: {}]
  %s6 = sld [smem:[#allocation0]]
  $region30: #{discriminator_forward.7} parent=0
    _
  %s8 = ssub.s32 1, %s6
  %s9 = scalar_select 0, %s8, %s6
  $region1: #{discriminator_forward.7} parent=0
    #allocation2 [shape = 'u8[512]{0}', space=vmem, size = 0x400, scoped, tag = 'output window, operand 0, single buffered']
    #allocation3 [shape = 's32[1]{0}', space=sflag, size = 0x4, scoped, tag = 'scoped memory for discriminator_forward.7']
    %10 = vsyncpa [#allocation3], 0
    // Predicated region
    $region2: #{discriminator_forward.7} parent=1 // pred_check
      _
    $region3: #{discriminator_forward.7} parent=1 // pred_check_branch
      %12 = sbr.rel (0) target = $region5
    $region4: #{discriminator_forward.7} parent=1 // pred_region
      _
    $region5: #{discriminator_forward.7} parent=1 // pred_fallthru
      _
    // Predicated region
    $region6: #{discriminator_forward.7} parent=1 // pred_check
      _
    $region7: #{discriminator_forward.7} parent=1 // pred_check_branch
      %14 = sbr.rel (0) target = $region9
    $region8: #{discriminator_forward.7} parent=1 // pred_region
      _
    $region9: #{discriminator_forward.7} parent=1 // pred_fallthru
      _
    // Predicated region
    $region10: #{discriminator_forward.7} parent=1 // pred_check
      _
    $region11: #{discriminator_forward.7} parent=1 // pred_check_branch
      %16 = sbr.rel (0) target = $region13
    $region12: #{discriminator_forward.7} parent=1 // pred_region
      _
    $region13: #{discriminator_forward.7} parent=1 // pred_fallthru
      _
    // Predicated region
    $region14: #{discriminator_forward.7} parent=1 // pred_check
      _
    $region15: #{discriminator_forward.7} parent=1 // pred_check_branch
      %18 = sbr.rel (0) target = $region17
    $region16: #{discriminator_forward.7} parent=1 // pred_region
      _
    $region17: #{discriminator_forward.7} parent=1 // pred_fallthru
      _
    // Predicated region
    $region18: #{discriminator_forward.7} parent=1 // pred_check
      _
    $region19: #{discriminator_forward.7} parent=1 // pred_check_branch
      %20 = sbr.rel (0) target = $region21
    $region20: #{discriminator_forward.7} parent=1 // pred_region
      _
    $region21: #{discriminator_forward.7} parent=1 // pred_fallthru
      _
    %v21 = vld [vmem:[%s0] sm:$0xff]
    %v22 = vld [vmem:[%s0 + $0x8] sm:$0xff]
    %v23 = vld [vmem:[%s0 + $0x10] sm:$0xff]
    %v24 = vld [vmem:[%s0 + $0x18] sm:$0xff]
    %v25 = vld [vmem:[%s0 + $0x20] sm:$0xff]
    %v26 = vld [vmem:[%s0 + $0x28] sm:$0xff]
    %v27 = vld [vmem:[%s0 + $0x30] sm:$0xff]
    %v28 = vld [vmem:[%s0 + $0x38] sm:$0xff]
    %v29 = vld [vmem:[%s0 + $0x40] sm:$0xff]
    %v30 = vld [vmem:[%s0 + $0x48] sm:$0xff]
    %v31 = vld [vmem:[%s0 + $0x50] sm:$0xff]
    %v32 = vld [vmem:[%s0 + $0x58] sm:$0xff]
    %v33 = vld [vmem:[%s0 + $0x60] sm:$0xff]
    %v34 = vld [vmem:[%s0 + $0x68] sm:$0xff]
    %v35 = vld [vmem:[%s0 + $0x70] sm:$0xff]
    %v36 = vld [vmem:[%s0 + $0x78] sm:$0xff]
    %v37 = vld [vmem:[%s1] sm:$0xf]
    %v38 = vld [vmem:[%s1 + $0x4] sm:$0xf]
    %v39 = vld [vmem:[%s1 + $0x8] sm:$0xf]
    %v40 = vld [vmem:[%s1 + $0xc] sm:$0xf]
    %v41 = vld [vmem:[%s1 + $0x10] sm:$0xf]
    %v42 = vld [vmem:[%s1 + $0x14] sm:$0xf]
    %v43 = vld [vmem:[%s1 + $0x18] sm:$0xf]
    %v44 = vld [vmem:[%s1 + $0x1c] sm:$0xf]
    %v45 = vld [vmem:[%s1 + $0x20] sm:$0xf]
    %v46 = vld [vmem:[%s1 + $0x24] sm:$0xf]
    %v47 = vld [vmem:[%s1 + $0x28] sm:$0xf]
    %v48 = vld [vmem:[%s1 + $0x2c] sm:$0xf]
    %v49 = vld [vmem:[%s1 + $0x30] sm:$0xf]
    %v50 = vld [vmem:[%s1 + $0x34] sm:$0xf]
    %v51 = vld [vmem:[%s1 + $0x38] sm:$0xf]
    %v52 = vld [vmem:[%s1 + $0x3c] sm:$0xf]
    %v53 = vld [vmem:[%s1 + $0x40] sm:$0xf]
    %v54 = vld [vmem:[%s1 + $0x44] sm:$0xf]
    %v55 = vld [vmem:[%s1 + $0x48] sm:$0xf]
    %v56 = vld [vmem:[%s1 + $0x4c] sm:$0xf]
    %v57 = vld [vmem:[%s1 + $0x50] sm:$0xf]
    %v58 = vld [vmem:[%s1 + $0x54] sm:$0xf]
    %v59 = vld [vmem:[%s1 + $0x58] sm:$0xf]
    %v60 = vld [vmem:[%s1 + $0x5c] sm:$0xf]
    %v61 = vld [vmem:[%s1 + $0x60] sm:$0xf]
    %v62 = vld [vmem:[%s1 + $0x64] sm:$0xf]
    %v63 = vld [vmem:[%s1 + $0x68] sm:$0xf]
    %v64 = vld [vmem:[%s1 + $0x6c] sm:$0xf]
    %v65 = vld [vmem:[%s1 + $0x70] sm:$0xf]
    %v66 = vld [vmem:[%s1 + $0x74] sm:$0xf]
    %v67 = vld [vmem:[%s1 + $0x78] sm:$0xf]
    %v68 = vld [vmem:[%s1 + $0x7c] sm:$0xf]
    %v69 = vld [vmem:[%s1 + $0x80] sm:$0xf]
    %v70 = vld [vmem:[%s1 + $0x84] sm:$0xf]
    %v71 = vld [vmem:[%s1 + $0x88] sm:$0xf]
    %v72 = vld [vmem:[%s1 + $0x8c] sm:$0xf]
    %v73 = vld [vmem:[%s1 + $0x90] sm:$0xf]
    %v74 = vld [vmem:[%s1 + $0x94] sm:$0xf]
    %v75 = vld [vmem:[%s1 + $0x98] sm:$0xf]
    %v76 = vld [vmem:[%s1 + $0x9c] sm:$0xf]
    %v77 = vld [vmem:[%s1 + $0xa0] sm:$0xf]
    %v78 = vld [vmem:[%s1 + $0xa4] sm:$0xf]
    %v79 = vld [vmem:[%s1 + $0xa8] sm:$0xf]
    %v80 = vld [vmem:[%s1 + $0xac] sm:$0xf]
    %v81 = vld [vmem:[%s1 + $0xb0] sm:$0xf]
    %v82 = vld [vmem:[%s1 + $0xb4] sm:$0xf]
    %v83 = vld [vmem:[%s1 + $0xb8] sm:$0xf]
    %v84 = vld [vmem:[%s1 + $0xbc] sm:$0xf]
    %v85 = vld [vmem:[%s1 + $0xc0] sm:$0xf]
    %v86 = vld [vmem:[%s1 + $0xc4] sm:$0xf]
    %v87 = vld [vmem:[%s1 + $0xc8] sm:$0xf]
    %v88 = vld [vmem:[%s1 + $0xcc] sm:$0xf]
    %v89 = vld [vmem:[%s1 + $0xd0] sm:$0xf]
    %v90 = vld [vmem:[%s1 + $0xd4] sm:$0xf]
    %v91 = vld [vmem:[%s1 + $0xd8] sm:$0xf]
    %v92 = vld [vmem:[%s1 + $0xdc] sm:$0xf]
    %v93 = vld [vmem:[%s1 + $0xe0] sm:$0xf]
    %v94 = vld [vmem:[%s1 + $0xe4] sm:$0xf]
    %v95 = vld [vmem:[%s1 + $0xe8] sm:$0xf]
    %v96 = vld [vmem:[%s1 + $0xec] sm:$0xf]
    %v97 = vld [vmem:[%s1 + $0xf0] sm:$0xf]
    %v98 = vld [vmem:[%s1 + $0xf4] sm:$0xf]
    %v99 = vld [vmem:[%s1 + $0xf8] sm:$0xf]
    %v100 = vld [vmem:[%s1 + $0xfc] sm:$0xf]
    %v117 = vunpack.c.l.b16 %v21
    %v118 = vunpack.c.h.b16 %v21
    %v119 = vunpack.c.l.b16 %v22
    %v120 = vunpack.c.h.b16 %v22
    %v121 = vunpack.c.l.b16 %v23
    %v122 = vunpack.c.h.b16 %v23
    %v123 = vunpack.c.l.b16 %v24
    %v124 = vunpack.c.h.b16 %v24
    %v125 = vunpack.c.l.b16 %v25
    %v126 = vunpack.c.h.b16 %v25
    %v127 = vunpack.c.l.b16 %v26
    %v128 = vunpack.c.h.b16 %v26
    %v129 = vunpack.c.l.b16 %v27
    %v130 = vunpack.c.h.b16 %v27
    %v131 = vunpack.c.l.b16 %v28
    %v132 = vunpack.c.h.b16 %v28
    %v133 = vunpack.c.l.b16 %v29
    %v134 = vunpack.c.h.b16 %v29
    %v135 = vunpack.c.l.b16 %v30
    %v136 = vunpack.c.h.b16 %v30
    %v137 = vunpack.c.l.b16 %v31
    %v138 = vunpack.c.h.b16 %v31
    %v139 = vunpack.c.l.b16 %v32
    %v140 = vunpack.c.h.b16 %v32
    %v141 = vunpack.c.l.b16 %v33
    %v142 = vunpack.c.h.b16 %v33
    %v143 = vunpack.c.l.b16 %v34
    %v144 = vunpack.c.h.b16 %v34
    %v145 = vunpack.c.l.b16 %v35
    %v146 = vunpack.c.h.b16 %v35
    %v147 = vunpack.c.l.b16 %v36
    %v148 = vunpack.c.h.b16 %v36
    %v149 = vpack.c.b16 %v121, %v117
    %v150 = vpack.c.b16 %v122, %v118
    %v151 = vpack.c.b16 %v123, %v119
    %v152 = vpack.c.b16 %v124, %v120
    %v153 = vpack.c.b16 %v129, %v125
    %v154 = vpack.c.b16 %v130, %v126
    %v155 = vpack.c.b16 %v131, %v127
    %v156 = vpack.c.b16 %v132, %v128
    %v157 = vpack.c.b16 %v137, %v133
    %v158 = vpack.c.b16 %v138, %v134
    %v159 = vpack.c.b16 %v139, %v135
    %v160 = vpack.c.b16 %v140, %v136
    %v161 = vpack.c.b16 %v145, %v141
    %v162 = vpack.c.b16 %v146, %v142
    %v163 = vpack.c.b16 %v147, %v143
    %v164 = vpack.c.b16 %v148, %v144
    %v245 = vunpack.c.l.b16 %v37
    %v246 = vunpack.c.l.b16 %v38
    %v247 = vunpack.c.l.b16 %v39
    %v248 = vunpack.c.l.b16 %v40
    %v249 = vunpack.c.l.b16 %v41
    %v250 = vunpack.c.l.b16 %v42
    %v251 = vunpack.c.l.b16 %v43
    %v252 = vunpack.c.l.b16 %v44
    %v253 = vunpack.c.l.b16 %v45
    %v254 = vunpack.c.l.b16 %v46
    %v255 = vunpack.c.l.b16 %v47
    %v256 = vunpack.c.l.b16 %v48
    %v257 = vunpack.c.l.b16 %v49
    %v258 = vunpack.c.l.b16 %v50
    %v259 = vunpack.c.l.b16 %v51
    %v260 = vunpack.c.l.b16 %v52
    %v261 = vunpack.c.l.b16 %v53
    %v262 = vunpack.c.l.b16 %v54
    %v263 = vunpack.c.l.b16 %v55
    %v264 = vunpack.c.l.b16 %v56
    %v265 = vunpack.c.l.b16 %v57
    %v266 = vunpack.c.l.b16 %v58
    %v267 = vunpack.c.l.b16 %v59
    %v268 = vunpack.c.l.b16 %v60
    %v269 = vunpack.c.l.b16 %v61
    %v270 = vunpack.c.l.b16 %v62
    %v271 = vunpack.c.l.b16 %v63
    %v272 = vunpack.c.l.b16 %v64
    %v273 = vunpack.c.l.b16 %v65
    %v274 = vunpack.c.l.b16 %v66
    %v275 = vunpack.c.l.b16 %v67
    %v276 = vunpack.c.l.b16 %v68
    %v277 = vunpack.c.l.b16 %v69
    %v278 = vunpack.c.l.b16 %v70
    %v279 = vunpack.c.l.b16 %v71
    %v280 = vunpack.c.l.b16 %v72
    %v281 = vunpack.c.l.b16 %v73
    %v282 = vunpack.c.l.b16 %v74
    %v283 = vunpack.c.l.b16 %v75
    %v284 = vunpack.c.l.b16 %v76
    %v285 = vunpack.c.l.b16 %v77
    %v286 = vunpack.c.l.b16 %v78
    %v287 = vunpack.c.l.b16 %v79
    %v288 = vunpack.c.l.b16 %v80
    %v289 = vunpack.c.l.b16 %v81
    %v290 = vunpack.c.l.b16 %v82
    %v291 = vunpack.c.l.b16 %v83
    %v292 = vunpack.c.l.b16 %v84
    %v293 = vunpack.c.l.b16 %v85
    %v294 = vunpack.c.l.b16 %v86
    %v295 = vunpack.c.l.b16 %v87
    %v296 = vunpack.c.l.b16 %v88
    %v297 = vunpack.c.l.b16 %v89
    %v298 = vunpack.c.l.b16 %v90
    %v299 = vunpack.c.l.b16 %v91
    %v300 = vunpack.c.l.b16 %v92
    %v301 = vunpack.c.l.b16 %v93
    %v302 = vunpack.c.l.b16 %v94
    %v303 = vunpack.c.l.b16 %v95
    %v304 = vunpack.c.l.b16 %v96
    %v305 = vunpack.c.l.b16 %v97
    %v306 = vunpack.c.l.b16 %v98
    %v307 = vunpack.c.l.b16 %v99
    %v308 = vunpack.c.l.b16 %v100
    %v309 = vpack.c.b16 %v246, %v245
    %v310 = vpack.c.b16 %v248, %v247
    %v311 = vpack.c.b16 %v250, %v249
    %v312 = vpack.c.b16 %v252, %v251
    %v313 = vpack.c.b16 %v254, %v253
    %v314 = vpack.c.b16 %v256, %v255
    %v315 = vpack.c.b16 %v258, %v257
    %v316 = vpack.c.b16 %v260, %v259
    %v317 = vpack.c.b16 %v262, %v261
    %v318 = vpack.c.b16 %v264, %v263
    %v319 = vpack.c.b16 %v266, %v265
    %v320 = vpack.c.b16 %v268, %v267
    %v321 = vpack.c.b16 %v270, %v269
    %v322 = vpack.c.b16 %v272, %v271
    %v323 = vpack.c.b16 %v274, %v273
    %v324 = vpack.c.b16 %v276, %v275
    %v325 = vpack.c.b16 %v278, %v277
    %v326 = vpack.c.b16 %v280, %v279
    %v327 = vpack.c.b16 %v282, %v281
    %v328 = vpack.c.b16 %v284, %v283
    %v329 = vpack.c.b16 %v286, %v285
    %v330 = vpack.c.b16 %v288, %v287
    %v331 = vpack.c.b16 %v290, %v289
    %v332 = vpack.c.b16 %v292, %v291
    %v333 = vpack.c.b16 %v294, %v293
    %v334 = vpack.c.b16 %v296, %v295
    %v335 = vpack.c.b16 %v298, %v297
    %v336 = vpack.c.b16 %v300, %v299
    %v337 = vpack.c.b16 %v302, %v301
    %v338 = vpack.c.b16 %v304, %v303
    %v339 = vpack.c.b16 %v306, %v305
    %v340 = vpack.c.b16 %v308, %v307
    %373 = vmatpush.bf16.msra.mxu0 %v316
    %374 = vmatpush.bf16.msra.mxu0 %v315
    %375 = vmatpush.bf16.msra.mxu0 %v314
    %376 = vmatpush.bf16.msra.mxu0 %v313
    %377 = vmatpush.bf16.msra.mxu0 %v312
    %378 = vmatpush.bf16.msra.mxu0 %v311
    %379 = vmatpush.bf16.msra.mxu0 %v310
    %380 = vmatpush.bf16.msra.mxu0 %v309
    %381 = vmatmul.bf16.gmra.mxu0 %v149
    %v382 = vpop.f32.mrf.mxu0
    %v383 = vadd.f32 0.0, %v382
    %v384 = vpop.f32.mrf.mxu0
    %v385 = vadd.f32 0.0, %v384
    %386 = vmatmul.bf16.gmra.mxu0 %v153
    %v387 = vpop.f32.mrf.mxu0
    %v388 = vadd.f32 0.0, %v387
    %v389 = vpop.f32.mrf.mxu0
    %v390 = vadd.f32 0.0, %v389
    %391 = vmatmul.bf16.gmra.mxu0 %v157
    %v392 = vpop.f32.mrf.mxu0
    %v393 = vadd.f32 0.0, %v392
    %v394 = vpop.f32.mrf.mxu0
    %v395 = vadd.f32 0.0, %v394
    %396 = vmatmul.bf16.gmra.mxu0 %v161
    %v397 = vpop.f32.mrf.mxu0
    %v398 = vadd.f32 0.0, %v397
    %v399 = vpop.f32.mrf.mxu0
    %v400 = vadd.f32 0.0, %v399
    %401 = vdwg.mxu0
    %402 = vmatpush.bf16.msra.mxu0 %v324
    %403 = vmatpush.bf16.msra.mxu0 %v323
    %404 = vmatpush.bf16.msra.mxu0 %v322
    %405 = vmatpush.bf16.msra.mxu0 %v321
    %406 = vmatpush.bf16.msra.mxu0 %v320
    %407 = vmatpush.bf16.msra.mxu0 %v319
    %408 = vmatpush.bf16.msra.mxu0 %v318
    %409 = vmatpush.bf16.msra.mxu0 %v317
    %410 = vmatmul.bf16.gmra.mxu0 %v150
    %v411 = vpop.f32.mrf.mxu0
    %v412 = vadd.f32 %v383, %v411
    %v413 = vpop.f32.mrf.mxu0
    %v414 = vadd.f32 %v385, %v413
    %415 = vmatmul.bf16.gmra.mxu0 %v154
    %v416 = vpop.f32.mrf.mxu0
    %v417 = vadd.f32 %v388, %v416
    %v418 = vpop.f32.mrf.mxu0
    %v419 = vadd.f32 %v390, %v418
    %420 = vmatmul.bf16.gmra.mxu0 %v158
    %v421 = vpop.f32.mrf.mxu0
    %v422 = vadd.f32 %v393, %v421
    %v423 = vpop.f32.mrf.mxu0
    %v424 = vadd.f32 %v395, %v423
    %425 = vmatmul.bf16.gmra.mxu0 %v162
    %v426 = vpop.f32.mrf.mxu0
    %v427 = vadd.f32 %v398, %v426
    %v428 = vpop.f32.mrf.mxu0
    %v429 = vadd.f32 %v400, %v428
    %430 = vdwg.mxu0
    %431 = vmatpush.bf16.msra.mxu0 %v332
    %432 = vmatpush.bf16.msra.mxu0 %v331
    %433 = vmatpush.bf16.msra.mxu0 %v330
    %434 = vmatpush.bf16.msra.mxu0 %v329
    %435 = vmatpush.bf16.msra.mxu0 %v328
    %436 = vmatpush.bf16.msra.mxu0 %v327
    %437 = vmatpush.bf16.msra.mxu0 %v326
    %438 = vmatpush.bf16.msra.mxu0 %v325
    %439 = vmatmul.bf16.gmra.mxu0 %v151
    %v440 = vpop.f32.mrf.mxu0
    %v441 = vadd.f32 %v412, %v440
    %v442 = vpop.f32.mrf.mxu0
    %v443 = vadd.f32 %v414, %v442
    %444 = vmatmul.bf16.gmra.mxu0 %v155
    %v445 = vpop.f32.mrf.mxu0
    %v446 = vadd.f32 %v417, %v445
    %v447 = vpop.f32.mrf.mxu0
    %v448 = vadd.f32 %v419, %v447
    %449 = vmatmul.bf16.gmra.mxu0 %v159
    %v450 = vpop.f32.mrf.mxu0
    %v451 = vadd.f32 %v422, %v450
    %v452 = vpop.f32.mrf.mxu0
    %v453 = vadd.f32 %v424, %v452
    %454 = vmatmul.bf16.gmra.mxu0 %v163
    %v455 = vpop.f32.mrf.mxu0
    %v456 = vadd.f32 %v427, %v455
    %v457 = vpop.f32.mrf.mxu0
    %v458 = vadd.f32 %v429, %v457
    %459 = vdwg.mxu0
    %460 = vmatpush.bf16.msra.mxu0 %v340
    %461 = vmatpush.bf16.msra.mxu0 %v339
    %462 = vmatpush.bf16.msra.mxu0 %v338
    %463 = vmatpush.bf16.msra.mxu0 %v337
    %464 = vmatpush.bf16.msra.mxu0 %v336
    %465 = vmatpush.bf16.msra.mxu0 %v335
    %466 = vmatpush.bf16.msra.mxu0 %v334
    %467 = vmatpush.bf16.msra.mxu0 %v333
    %468 = vmatmul.bf16.gmra.mxu0 %v152
    %v469 = vpop.f32.mrf.mxu0
    %v470 = vadd.f32 %v441, %v469
    %v471 = vpop.f32.mrf.mxu0
    %v472 = vadd.f32 %v443, %v471
    %473 = vmatmul.bf16.gmra.mxu0 %v156
    %v474 = vpop.f32.mrf.mxu0
    %v475 = vadd.f32 %v446, %v474
    %v476 = vpop.f32.mrf.mxu0
    %v477 = vadd.f32 %v448, %v476
    %478 = vmatmul.bf16.gmra.mxu0 %v160
    %v479 = vpop.f32.mrf.mxu0
    %v480 = vadd.f32 %v451, %v479
    %v481 = vpop.f32.mrf.mxu0
    %v482 = vadd.f32 %v453, %v481
    %483 = vmatmul.bf16.gmra.mxu0 %v164
    %v484 = vpop.f32.mrf.mxu0
    %v485 = vadd.f32 %v456, %v484
    %v486 = vpop.f32.mrf.mxu0
    %v487 = vadd.f32 %v458, %v486
    %488 = vdwg.mxu0
    %vm489 = vcmask 261120
    %v490 = vsel %vm489, %v470, 0.0
    %491 = vadd.xlane.f32.xlu0 %v490
    %v492 = vpop.xlane.xlu0 %491
    %v493 = vsel %vm489, %v472, 0.0
    %494 = vadd.xlane.f32.xlu0 %v493
    %v495 = vpop.xlane.xlu0 %494
    %v496 = vsel %vm489, %v475, 0.0
    %497 = vadd.xlane.f32.xlu0 %v496
    %v498 = vpop.xlane.xlu0 %497
    %v499 = vsel %vm489, %v477, 0.0
    %500 = vadd.xlane.f32.xlu0 %v499
    %v501 = vpop.xlane.xlu0 %500
    %v502 = vsel %vm489, %v480, 0.0
    %503 = vadd.xlane.f32.xlu0 %v502
    %v504 = vpop.xlane.xlu0 %503
    %v505 = vsel %vm489, %v482, 0.0
    %506 = vadd.xlane.f32.xlu0 %v505
    %v507 = vpop.xlane.xlu0 %506
    %v508 = vsel %vm489, %v485, 0.0
    %509 = vadd.xlane.f32.xlu0 %v508
    %v510 = vpop.xlane.xlu0 %509
    %v511 = vsel %vm489, %v487, 0.0
    %512 = vadd.xlane.f32.xlu0 %v511
    %v513 = vpop.xlane.xlu0 %512
    %v514 = vrcp.pop 32.0
    %v515 = vmul.f32 32.0, %v514
    %v516 = vsub.f32 1.0, %v515
    %v517 = vmul.f32 %v514, %v516
    %v518 = vadd.f32 %v514, %v517
    %vm519 = vweird.f32 %v514
    %v520 = vsel %vm519, %v514, %v518
    %v521 = vmul.f32 %v492, %v520
    %v522 = vmul.f32 %v495, %v520
    %v523 = vmul.f32 %v498, %v520
    %v524 = vmul.f32 %v501, %v520
    %v525 = vmul.f32 %v504, %v520
    %v526 = vmul.f32 %v507, %v520
    %v527 = vmul.f32 %v510, %v520
    %v528 = vmul.f32 %v513, %v520
    %v529 = vmul.f32 %v470, %v470
    %v530 = vmul.f32 %v472, %v472
    %v531 = vmul.f32 %v475, %v475
    %v532 = vmul.f32 %v477, %v477
    %v533 = vmul.f32 %v480, %v480
    %v534 = vmul.f32 %v482, %v482
    %v535 = vmul.f32 %v485, %v485
    %v536 = vmul.f32 %v487, %v487
    %v537 = vsel %vm489, %v529, 0.0
    %538 = vadd.xlane.f32.xlu0 %v537
    %v539 = vpop.xlane.xlu0 %538
    %v540 = vsel %vm489, %v530, 0.0
    %541 = vadd.xlane.f32.xlu0 %v540
    %v542 = vpop.xlane.xlu0 %541
    %v543 = vsel %vm489, %v531, 0.0
    %544 = vadd.xlane.f32.xlu0 %v543
    %v545 = vpop.xlane.xlu0 %544
    %v546 = vsel %vm489, %v532, 0.0
    %547 = vadd.xlane.f32.xlu0 %v546
    %v548 = vpop.xlane.xlu0 %547
    %v549 = vsel %vm489, %v533, 0.0
    %550 = vadd.xlane.f32.xlu0 %v549
    %v551 = vpop.xlane.xlu0 %550
    %v552 = vsel %vm489, %v534, 0.0
    %553 = vadd.xlane.f32.xlu0 %v552
    %v554 = vpop.xlane.xlu0 %553
    %v555 = vsel %vm489, %v535, 0.0
    %556 = vadd.xlane.f32.xlu0 %v555
    %v557 = vpop.xlane.xlu0 %556
    %v558 = vsel %vm489, %v536, 0.0
    %559 = vadd.xlane.f32.xlu0 %v558
    %v560 = vpop.xlane.xlu0 %559
    %v561 = vmul.f32 %v539, %v520
    %v562 = vmul.f32 %v542, %v520
    %v563 = vmul.f32 %v545, %v520
    %v564 = vmul.f32 %v548, %v520
    %v565 = vmul.f32 %v551, %v520
    %v566 = vmul.f32 %v554, %v520
    %v567 = vmul.f32 %v557, %v520
    %v568 = vmul.f32 %v560, %v520
    %v569 = vmul.f32 %v521, %v521
    %v570 = vmul.f32 %v522, %v522
    %v571 = vmul.f32 %v523, %v523
    %v572 = vmul.f32 %v524, %v524
    %v573 = vmul.f32 %v525, %v525
    %v574 = vmul.f32 %v526, %v526
    %v575 = vmul.f32 %v527, %v527
    %v576 = vmul.f32 %v528, %v528
    %v577 = vsub.f32 %v561, %v569
    %v578 = vsub.f32 %v562, %v570
    %v579 = vsub.f32 %v563, %v571
    %v580 = vsub.f32 %v564, %v572
    %v581 = vsub.f32 %v565, %v573
    %v582 = vsub.f32 %v566, %v574
    %v583 = vsub.f32 %v567, %v575
    %v584 = vsub.f32 %v568, %v576
    %v585 = vld [vmem:[%s2] sm:$0xff]
    %v586 = vld [vmem:[%s2 + $0x8] sm:$0xff]
    %v587 = vld [vmem:[%s2 + $0x10] sm:$0xff]
    %v588 = vld [vmem:[%s2 + $0x18] sm:$0xff]
    %v589 = vld [vmem:[%s2 + $0x20] sm:$0xff]
    %v590 = vld [vmem:[%s2 + $0x28] sm:$0xff]
    %v591 = vld [vmem:[%s2 + $0x30] sm:$0xff]
    %v592 = vld [vmem:[%s2 + $0x38] sm:$0xff]
    %v593 = vadd.f32 %v577, 1e-05
    %v594 = vadd.f32 %v578, 1e-05
    %v595 = vadd.f32 %v579, 1e-05
    %v596 = vadd.f32 %v580, 1e-05
    %v597 = vadd.f32 %v581, 1e-05
    %v598 = vadd.f32 %v582, 1e-05
    %v599 = vadd.f32 %v583, 1e-05
    %v600 = vadd.f32 %v584, 1e-05
    %v601 = vrsqrt.pop %v593
    %v602 = vmul.f32 %v601, %v593
    %v603 = vmul.f32 %v602, %v601
    %v604 = vmul.f32 0.5, %v603
    %v605 = vsub.f32 1.5, %v604
    %v606 = vmul.f32 %v601, %v605
    %vm607 = vweird.f32 %v593
    %vm608 = vweird.f32 %v601
    %vm609 = vmor %vm607, %vm608
    %v610 = vsel %vm609, %v601, %v606
    %v611 = vrsqrt.pop %v594
    %v612 = vmul.f32 %v611, %v594
    %v613 = vmul.f32 %v612, %v611
    %v614 = vmul.f32 0.5, %v613
    %v615 = vsub.f32 1.5, %v614
    %v616 = vmul.f32 %v611, %v615
    %vm617 = vweird.f32 %v594
    %vm618 = vweird.f32 %v611
    %vm619 = vmor %vm617, %vm618
    %v620 = vsel %vm619, %v611, %v616
    %v621 = vrsqrt.pop %v595
    %v622 = vmul.f32 %v621, %v595
    %v623 = vmul.f32 %v622, %v621
    %v624 = vmul.f32 0.5, %v623
    %v625 = vsub.f32 1.5, %v624
    %v626 = vmul.f32 %v621, %v625
    %vm627 = vweird.f32 %v595
    %vm628 = vweird.f32 %v621
    %vm629 = vmor %vm627, %vm628
    %v630 = vsel %vm629, %v621, %v626
    %v631 = vrsqrt.pop %v596
    %v632 = vmul.f32 %v631, %v596
    %v633 = vmul.f32 %v632, %v631
    %v634 = vmul.f32 0.5, %v633
    %v635 = vsub.f32 1.5, %v634
    %v636 = vmul.f32 %v631, %v635
    %vm637 = vweird.f32 %v596
    %vm638 = vweird.f32 %v631
    %vm639 = vmor %vm637, %vm638
    %v640 = vsel %vm639, %v631, %v636
    %v641 = vrsqrt.pop %v597
    %v642 = vmul.f32 %v641, %v597
    %v643 = vmul.f32 %v642, %v641
    %v644 = vmul.f32 0.5, %v643
    %v645 = vsub.f32 1.5, %v644
    %v646 = vmul.f32 %v641, %v645
    %vm647 = vweird.f32 %v597
    %vm648 = vweird.f32 %v641
    %vm649 = vmor %vm647, %vm648
    %v650 = vsel %vm649, %v641, %v646
    %v651 = vrsqrt.pop %v598
    %v652 = vmul.f32 %v651, %v598
    %v653 = vmul.f32 %v652, %v651
    %v654 = vmul.f32 0.5, %v653
    %v655 = vsub.f32 1.5, %v654
    %v656 = vmul.f32 %v651, %v655
    %vm657 = vweird.f32 %v598
    %vm658 = vweird.f32 %v651
    %vm659 = vmor %vm657, %vm658
    %v660 = vsel %vm659, %v651, %v656
    %v661 = vrsqrt.pop %v599
    %v662 = vmul.f32 %v661, %v599
    %v663 = vmul.f32 %v662, %v661
    %v664 = vmul.f32 0.5, %v663
    %v665 = vsub.f32 1.5, %v664
    %v666 = vmul.f32 %v661, %v665
    %vm667 = vweird.f32 %v599
    %vm668 = vweird.f32 %v661
    %vm669 = vmor %vm667, %vm668
    %v670 = vsel %vm669, %v661, %v666
    %v671 = vrsqrt.pop %v600
    %v672 = vmul.f32 %v671, %v600
    %v673 = vmul.f32 %v672, %v671
    %v674 = vmul.f32 0.5, %v673
    %v675 = vsub.f32 1.5, %v674
    %v676 = vmul.f32 %v671, %v675
    %vm677 = vweird.f32 %v600
    %vm678 = vweird.f32 %v671
    %vm679 = vmor %vm677, %vm678
    %v680 = vsel %vm679, %v671, %v676
    %v681 = vmul.f32 %v585, %v610
    %v682 = vmul.f32 %v586, %v620
    %v683 = vmul.f32 %v587, %v630
    %v684 = vmul.f32 %v588, %v640
    %v685 = vmul.f32 %v589, %v650
    %v686 = vmul.f32 %v590, %v660
    %v687 = vmul.f32 %v591, %v670
    %v688 = vmul.f32 %v592, %v680
    %v689 = vld [vmem:[%s3] sm:$0xff]
    %v690 = vld [vmem:[%s3 + $0x8] sm:$0xff]
    %v691 = vld [vmem:[%s3 + $0x10] sm:$0xff]
    %v692 = vld [vmem:[%s3 + $0x18] sm:$0xff]
    %v693 = vld [vmem:[%s3 + $0x20] sm:$0xff]
    %v694 = vld [vmem:[%s3 + $0x28] sm:$0xff]
    %v695 = vld [vmem:[%s3 + $0x30] sm:$0xff]
    %v696 = vld [vmem:[%s3 + $0x38] sm:$0xff]
    %v697 = vmul.f32 %v521, %v681
    %v698 = vmul.f32 %v522, %v682
    %v699 = vmul.f32 %v523, %v683
    %v700 = vmul.f32 %v524, %v684
    %v701 = vmul.f32 %v525, %v685
    %v702 = vmul.f32 %v526, %v686
    %v703 = vmul.f32 %v527, %v687
    %v704 = vmul.f32 %v528, %v688
    %v705 = vsub.f32 %v689, %v697
    %v706 = vsub.f32 %v690, %v698
    %v707 = vsub.f32 %v691, %v699
    %v708 = vsub.f32 %v692, %v700
    %v709 = vsub.f32 %v693, %v701
    %v710 = vsub.f32 %v694, %v702
    %v711 = vsub.f32 %v695, %v703
    %v712 = vsub.f32 %v696, %v704
    %714 = vset.pattern.permute.xlu0 0
    %715 = vperm.xlu0 %714, %v681
    %v716 = vpop.permute.xlu0 %715
    %719 = vset.pattern.permute.xlu0 0
    %720 = vperm.xlu0 %719, %v682
    %v721 = vpop.permute.xlu0 %720
    %724 = vset.pattern.permute.xlu0 0
    %725 = vperm.xlu0 %724, %v683
    %v726 = vpop.permute.xlu0 %725
    %729 = vset.pattern.permute.xlu0 0
    %730 = vperm.xlu0 %729, %v684
    %v731 = vpop.permute.xlu0 %730
    %734 = vset.pattern.permute.xlu0 0
    %735 = vperm.xlu0 %734, %v685
    %v736 = vpop.permute.xlu0 %735
    %739 = vset.pattern.permute.xlu0 0
    %740 = vperm.xlu0 %739, %v686
    %v741 = vpop.permute.xlu0 %740
    %744 = vset.pattern.permute.xlu0 0
    %745 = vperm.xlu0 %744, %v687
    %v746 = vpop.permute.xlu0 %745
    %749 = vset.pattern.permute.xlu0 0
    %750 = vperm.xlu0 %749, %v688
    %v751 = vpop.permute.xlu0 %750
    %v753 = vmul.f32 %v470, %v716
    %v754 = vmul.f32 %v472, %v721
    %v755 = vmul.f32 %v475, %v726
    %v756 = vmul.f32 %v477, %v731
    %v757 = vmul.f32 %v480, %v736
    %v758 = vmul.f32 %v482, %v741
    %v759 = vmul.f32 %v485, %v746
    %v760 = vmul.f32 %v487, %v751
    %762 = vset.pattern.permute.xlu0 0
    %763 = vperm.xlu0 %762, %v705
    %v764 = vpop.permute.xlu0 %763
    %767 = vset.pattern.permute.xlu0 0
    %768 = vperm.xlu0 %767, %v706
    %v769 = vpop.permute.xlu0 %768
    %772 = vset.pattern.permute.xlu0 0
    %773 = vperm.xlu0 %772, %v707
    %v774 = vpop.permute.xlu0 %773
    %777 = vset.pattern.permute.xlu0 0
    %778 = vperm.xlu0 %777, %v708
    %v779 = vpop.permute.xlu0 %778
    %782 = vset.pattern.permute.xlu0 0
    %783 = vperm.xlu0 %782, %v709
    %v784 = vpop.permute.xlu0 %783
    %787 = vset.pattern.permute.xlu0 0
    %788 = vperm.xlu0 %787, %v710
    %v789 = vpop.permute.xlu0 %788
    %792 = vset.pattern.permute.xlu0 0
    %793 = vperm.xlu0 %792, %v711
    %v794 = vpop.permute.xlu0 %793
    %797 = vset.pattern.permute.xlu0 0
    %798 = vperm.xlu0 %797, %v712
    %v799 = vpop.permute.xlu0 %798
    %v801 = vadd.f32 %v753, %v764
    %v802 = vadd.f32 %v754, %v769
    %v803 = vadd.f32 %v755, %v774
    %v804 = vadd.f32 %v756, %v779
    %v805 = vadd.f32 %v757, %v784
    %v806 = vadd.f32 %v758, %v789
    %v807 = vadd.f32 %v759, %v794
    %v808 = vadd.f32 %v760, %v799
    %vm809 = vcmp.ge.f32.partialorder %v801, 0.0
    %vm810 = vcmp.ge.f32.partialorder %v802, 0.0
    %vm811 = vcmp.ge.f32.partialorder %v803, 0.0
    %vm812 = vcmp.ge.f32.partialorder %v804, 0.0
    %vm813 = vcmp.ge.f32.partialorder %v805, 0.0
    %vm814 = vcmp.ge.f32.partialorder %v806, 0.0
    %vm815 = vcmp.ge.f32.partialorder %v807, 0.0
    %vm816 = vcmp.ge.f32.partialorder %v808, 0.0
    %v817 = vmul.f32 %v801, 0.2
    %v818 = vmul.f32 %v802, 0.2
    %v819 = vmul.f32 %v803, 0.2
    %v820 = vmul.f32 %v804, 0.2
    %v821 = vmul.f32 %v805, 0.2
    %v822 = vmul.f32 %v806, 0.2
    %v823 = vmul.f32 %v807, 0.2
    %v824 = vmul.f32 %v808, 0.2
    %v825 = vsel %vm809, %v801, %v817
    %v826 = vsel %vm810, %v802, %v818
    %v827 = vsel %vm811, %v803, %v819
    %v828 = vsel %vm812, %v804, %v820
    %v829 = vsel %vm813, %v805, %v821
    %v830 = vsel %vm814, %v806, %v822
    %v831 = vsel %vm815, %v807, %v823
    %v832 = vsel %vm816, %v808, %v824
    %v833 = vld [vmem:[%s4] sm:$0xff]
    %v834 = vld [vmem:[%s4 + $0x8] sm:$0xff]
    %v835 = vld [vmem:[%s4 + $0x10] sm:$0xff]
    %v836 = vld [vmem:[%s4 + $0x18] sm:$0xff]
    %v837 = vld [vmem:[%s4 + $0x20] sm:$0xff]
    %v838 = vld [vmem:[%s4 + $0x28] sm:$0xff]
    %v839 = vld [vmem:[%s4 + $0x30] sm:$0xff]
    %v840 = vld [vmem:[%s4 + $0x38] sm:$0xff]
    %v841 = vmul.f32 %v825, %v833
    %v842 = vmul.f32 %v826, %v834
    %v843 = vmul.f32 %v827, %v835
    %v844 = vmul.f32 %v828, %v836
    %v845 = vmul.f32 %v829, %v837
    %v846 = vmul.f32 %v830, %v838
    %v847 = vmul.f32 %v831, %v839
    %v848 = vmul.f32 %v832, %v840
    %vm849 = vcmask 130048
    %v850 = vsel %vm849, %v841, 0.0
    %851 = vadd.xlane.f32.xlu0 %v850
    %v852 = vpop.xlane.xlu0 %851
    %v853 = vsel %vm849, %v842, 0.0
    %854 = vadd.xlane.f32.xlu0 %v853
    %v855 = vpop.xlane.xlu0 %854
    %v856 = vsel %vm849, %v843, 0.0
    %857 = vadd.xlane.f32.xlu0 %v856
    %v858 = vpop.xlane.xlu0 %857
    %v859 = vsel %vm849, %v844, 0.0
    %860 = vadd.xlane.f32.xlu0 %v859
    %v861 = vpop.xlane.xlu0 %860
    %v862 = vsel %vm849, %v845, 0.0
    %863 = vadd.xlane.f32.xlu0 %v862
    %v864 = vpop.xlane.xlu0 %863
    %v865 = vsel %vm849, %v846, 0.0
    %866 = vadd.xlane.f32.xlu0 %v865
    %v867 = vpop.xlane.xlu0 %866
    %v868 = vsel %vm849, %v847, 0.0
    %869 = vadd.xlane.f32.xlu0 %v868
    %v870 = vpop.xlane.xlu0 %869
    %v871 = vsel %vm849, %v848, 0.0
    %872 = vadd.xlane.f32.xlu0 %v871
    %v873 = vpop.xlane.xlu0 %872
    %v874 = vadd.f32 %v852, %v855
    %v875 = vadd.f32 %v874, %v858
    %v876 = vadd.f32 %v875, %v861
    %v877 = vadd.f32 %v876, %v864
    %v878 = vadd.f32 %v877, %v867
    %v879 = vadd.f32 %v878, %v870
    %v880 = vadd.f32 %v879, %v873
    %v881 = vrot.slane %v880, 4
    %v882 = vadd.f32 %v880, %v881
    %v883 = vrot.slane %v882, 2
    %v884 = vadd.f32 %v882, %v883
    %v885 = vrot.slane %v884, 1
    %v886 = vadd.f32 %v884, %v885
    %v887 = vsub.f32 0.0, %v886
    %v888 = vmul.f32 %v887, 1.442695
    %v889 = vpow.pop %v888
    %v890 = vadd.f32 %v889, 1.0
    %v891 = vrcp.pop %v890
    %v892 = vmul.f32 %v890, %v891
    %v893 = vsub.f32 1.0, %v892
    %v894 = vmul.f32 %v891, %v893
    %v895 = vadd.f32 %v891, %v894
    %vm896 = vweird.f32 %v890
    %vm897 = vweird.f32 %v891
    %vm898 = vmor %vm896, %vm897
    %v899 = vsel %vm898, %v891, %v895
    %v900 = vand.u32 2147483647, %v890
    %vm901 = vcmp.eq.f32.partialorder %v900, 8.507059e+37
    %v902 = vand.u32 %v890, 2147483648
    %v903 = vor.u32 1.1754944e-38, %v902
    %v904 = vsel %vm901, %v903, %v899
    %v905 = vmul.f32 1.0, %v904
    %vm906 = vcmask 0
    %907 = vst.msk [vmem:[#allocation2] sm:$0x1] %vm906, %v905
    %v908 = vld [vmem:[%s4] sm:$0xff]
    %v909 = vld [vmem:[%s4 + $0x8] sm:$0xff]
    %v910 = vld [vmem:[%s4 + $0x10] sm:$0xff]
    %v911 = vld [vmem:[%s4 + $0x18] sm:$0xff]
    %v912 = vld [vmem:[%s4 + $0x20] sm:$0xff]
    %v913 = vld [vmem:[%s4 + $0x28] sm:$0xff]
    %v914 = vld [vmem:[%s4 + $0x30] sm:$0xff]
    %v915 = vld [vmem:[%s4 + $0x38] sm:$0xff]
    %924 = vrot.lane.b32.xlu0 %v908, 16
    %v925 = vpop.permute.xlu0 %924
    %926 = vrot.lane.b32.xlu0 %v909, 16
    %v927 = vpop.permute.xlu0 %926
    %928 = vrot.lane.b32.xlu0 %v910, 16
    %v929 = vpop.permute.xlu0 %928
    %930 = vrot.lane.b32.xlu0 %v911, 16
    %v931 = vpop.permute.xlu0 %930
    %932 = vrot.lane.b32.xlu0 %v912, 16
    %v933 = vpop.permute.xlu0 %932
    %934 = vrot.lane.b32.xlu0 %v913, 16
    %v935 = vpop.permute.xlu0 %934
    %936 = vrot.lane.b32.xlu0 %v914, 16
    %v937 = vpop.permute.xlu0 %936
    %938 = vrot.lane.b32.xlu0 %v915, 16
    %v939 = vpop.permute.xlu0 %938
    %v948 = vmul.f32 %v825, %v925
    %v949 = vmul.f32 %v826, %v927
    %v950 = vmul.f32 %v827, %v929
    %v951 = vmul.f32 %v828, %v931
    %v952 = vmul.f32 %v829, %v933
    %v953 = vmul.f32 %v830, %v935
    %v954 = vmul.f32 %v831, %v937
    %v955 = vmul.f32 %v832, %v939
    %964 = vrot.lane.b32.xlu0 %v948, 112
    %v965 = vpop.permute.xlu0 %964
    %966 = vrot.lane.b32.xlu0 %v949, 112
    %v967 = vpop.permute.xlu0 %966
    %968 = vrot.lane.b32.xlu0 %v950, 112
    %v969 = vpop.permute.xlu0 %968
    %970 = vrot.lane.b32.xlu0 %v951, 112
    %v971 = vpop.permute.xlu0 %970
    %972 = vrot.lane.b32.xlu0 %v952, 112
    %v973 = vpop.permute.xlu0 %972
    %974 = vrot.lane.b32.xlu0 %v953, 112
    %v975 = vpop.permute.xlu0 %974
    %976 = vrot.lane.b32.xlu0 %v954, 112
    %v977 = vpop.permute.xlu0 %976
    %978 = vrot.lane.b32.xlu0 %v955, 112
    %v979 = vpop.permute.xlu0 %978
    %v988 = vsel %vm849, %v965, 0.0
    %989 = vadd.xlane.f32.xlu0 %v988
    %v990 = vpop.xlane.xlu0 %989
    %v991 = vsel %vm849, %v967, 0.0
    %992 = vadd.xlane.f32.xlu0 %v991
    %v993 = vpop.xlane.xlu0 %992
    %v994 = vsel %vm849, %v969, 0.0
    %995 = vadd.xlane.f32.xlu0 %v994
    %v996 = vpop.xlane.xlu0 %995
    %v997 = vsel %vm849, %v971, 0.0
    %998 = vadd.xlane.f32.xlu0 %v997
    %v999 = vpop.xlane.xlu0 %998
    %v1000 = vsel %vm849, %v973, 0.0
    %1001 = vadd.xlane.f32.xlu0 %v1000
    %v1002 = vpop.xlane.xlu0 %1001
    %v1003 = vsel %vm849, %v975, 0.0
    %1004 = vadd.xlane.f32.xlu0 %v1003
    %v1005 = vpop.xlane.xlu0 %1004
    %v1006 = vsel %vm849, %v977, 0.0
    %1007 = vadd.xlane.f32.xlu0 %v1006
    %v1008 = vpop.xlane.xlu0 %1007
    %v1009 = vsel %vm849, %v979, 0.0
    %1010 = vadd.xlane.f32.xlu0 %v1009
    %v1011 = vpop.xlane.xlu0 %1010
    %v1012 = vadd.f32 %v990, %v993
    %v1013 = vadd.f32 %v1012, %v996
    %v1014 = vadd.f32 %v1013, %v999
    %v1015 = vadd.f32 %v1014, %v1002
    %v1016 = vadd.f32 %v1015, %v1005
    %v1017 = vadd.f32 %v1016, %v1008
    %v1018 = vadd.f32 %v1017, %v1011
    %v1019 = vrot.slane %v1018, 4
    %v1020 = vadd.f32 %v1018, %v1019
    %v1021 = vrot.slane %v1020, 2
    %v1022 = vadd.f32 %v1020, %v1021
    %v1023 = vrot.slane %v1022, 1
    %v1024 = vadd.f32 %v1022, %v1023
    %v1025 = vsub.f32 0.0, %v1024
    %v1026 = vmul.f32 %v1025, 1.442695
    %v1027 = vpow.pop %v1026
    %v1028 = vadd.f32 %v1027, 1.0
    %v1029 = vrcp.pop %v1028
    %v1030 = vmul.f32 %v1028, %v1029
    %v1031 = vsub.f32 1.0, %v1030
    %v1032 = vmul.f32 %v1029, %v1031
    %v1033 = vadd.f32 %v1029, %v1032
    %vm1034 = vweird.f32 %v1028
    %vm1035 = vweird.f32 %v1029
    %vm1036 = vmor %vm1034, %vm1035
    %v1037 = vsel %vm1036, %v1029, %v1033
    %v1038 = vand.u32 2147483647, %v1028
    %vm1039 = vcmp.eq.f32.partialorder %v1038, 8.507059e+37
    %v1040 = vand.u32 %v1028, 2147483648
    %v1041 = vor.u32 1.1754944e-38, %v1040
    %v1042 = vsel %vm1039, %v1041, %v1037
    %v1043 = vmul.f32 1.0, %v1042
    %vm1044 = vcmask 8200
    %1045 = vst.msk [vmem:[#allocation2] sm:$0x1] %vm1044, %v1043
    // Predicated region
    $region22: #{discriminator_forward.7} parent=1 // pred_check
      _
    $region23: #{discriminator_forward.7} parent=1 // pred_check_branch
      %1047 = sbr.rel (0) target = $region25
    $region24: #{discriminator_forward.7} parent=1 // pred_region
      %1049 = vsyncadd [#allocation3], 0
      %s1051 = sshll.u32 [#allocation2], 4
      %s1052 = int_to_ptr.vmem [resolvable:$true] %s1051
      %s1053 = sshll.u32 %s5, 4
      %s1054 = int_to_ptr.hbm [resolvable:$true] %s1053
      %1056 = dma.vmem_to_hbm [thread:$0]  %s1052, 16, %s1054, [#allocation3]
    $region25: #{discriminator_forward.7} parent=1 // pred_fallthru
      _
    // Predicated region
    $region26: #{discriminator_forward.7} parent=1 // pred_check
      _
    $region27: #{discriminator_forward.7} parent=1 // pred_check_branch
      %1058 = sbr.rel (0) target = $region29
    $region28: #{discriminator_forward.7} parent=1 // pred_region
      %1060 = dma.done [#allocation3], 16
    $region29: #{discriminator_forward.7} parent=1 // pred_fallthru
      _
    %1061 = vsyncpa [#allocation3], 1

</llo_original>
